<compile_context>
chip_gen: v7x
topology: tpu7x:2x2x1
jax: 0.10.0
libtpu: 0.0.40
codegen_flags: <defaults>
</compile_context>

<pallas_src>
import functools

import jax
import jax.numpy as jnp
from jax import lax
from jax.experimental import pallas as pl
from jax.experimental.pallas import tpu as pltpu


# ------------------------------ Pallas kernel -------------------------------

def _fused_backbone_kernel(x_ref, w1_ref, b1_ref, w2_ref, b2_ref,
                           wfc_ref, bfc_ref,
                           conv2_ref, pool_ref, fc_ref,
                           *, B, H, W, CIN, C1, C2, HID):
    """Backbone forward for B images, channel-first, fully VMEM-resident.

    x_ref    : (B, CIN, H*W)   input images, flat spatial on lanes
    w1_ref   : (9, C1, CIN)    conv1 weights, one (C1, CIN) matrix per 3x3 tap
    b1_ref   : (C1, 1)         conv1 bias (column)
    w2_ref   : (9, C2, C1)     conv2 weights per tap
    b2_ref   : (C2, 1)         conv2 bias (column)
    wfc_ref  : (HID, C2)       fc weight (torch (out, in) layout)
    bfc_ref  : (HID, 1)        fc bias (column)
    conv2_ref: (B, C2, H*W)    conv2 pre-activation (hooked), lane-dense NCHW slab
    pool_ref : (B, C2, 1)      global-avg-pool features
    fc_ref   : (B, HID, 1)     fc output
    """
    HW = H * W
    inv_hw = 1.0 / HW
    # Lane-tile-aligned zero extension; must cover a +-(W+1) shift.
    padw = ((W + 1 + 127) // 128) * 128

    def conv3x3(x_flat, w_ref, b_ref, cin):
        # Column-edge validity masks; vertical (row) edges are handled by the
        # zero extension of the flat axis, so only w+-1 wraps need masking.
        w_idx = lax.broadcasted_iota(jnp.int32, (cin, HW), 1) % W
        mask_l = w_idx > 0          # valid lanes for a dw = -1 tap
        mask_r = w_idx < (W - 1)    # valid lanes for a dw = +1 tap

        zpad = jnp.zeros((cin, padw), jnp.float32)
        xext = jnp.concatenate([zpad, x_flat, zpad], axis=-1)   # (cin, HW + 2*padw)

        acc = None
        for dh in (-1, 0, 1):
            for dw in (-1, 0, 1):
                t = (dh + 1) * 3 + (dw + 1)                     # tap index = kh*3 + kw
                lo = padw + dh * W + dw
                tap = xext[:, lo:lo + HW]                       # lane shift, stays (cin, HW)
                if dw == -1:
                    tap = jnp.where(mask_l, tap, 0.0)
                elif dw == 1:
                    tap = jnp.where(mask_r, tap, 0.0)
                d = jnp.dot(w_ref[t], tap, preferred_element_type=jnp.float32)
                acc = d if acc is None else acc + d
        return acc + b_ref[...]                                 # (cout, HW)

    for b in range(B):                                          # static unroll (B small)
        x_flat = x_ref[b]                                                   # (CIN, HW)
        h1 = jnp.maximum(conv3x3(x_flat, w1_ref, b1_ref, CIN), 0.0)         # (C1, HW)
        c2 = conv3x3(h1, w2_ref, b2_ref, C1)                                # (C2, HW)
        conv2_ref[b] = c2.astype(conv2_ref.dtype)                           # hook: conv2

        r = jnp.maximum(c2, 0.0)
        pooled = jnp.sum(r, axis=-1, keepdims=True) * inv_hw                # (C2, 1)
        pool_ref[b] = pooled.astype(pool_ref.dtype)                         # hook: avgpool
        fc = jnp.dot(wfc_ref[...], pooled,
                     preferred_element_type=jnp.float32) + bfc_ref[...]     # (HID, 1)
        fc_ref[b] = fc.astype(fc_ref.dtype)                                 # hook: fc


# ------------------------------ JAX wrapper ----------------------------------

def _pick_block_batch(n):
    """Largest per-step batch B (<=8) dividing N that still leaves >=2 grid steps."""
    if n < 2:
        return 1
    return max(d for d in range(1, min(n, 8) + 1) if n % d == 0 and n // d >= 2)


def feature_extractor_forward(x_nchw, params):
    """Mirrors FeatureExtractor_for_source_code.forward: runs the backbone once and
    returns {layer_id: hooked_output} for layers = ['conv2', 'avgpool', 'fc'].
    Params are in PyTorch layouts: conv weights OIHW, fc weight (out, in)."""
    N, CIN, H, W = x_nchw.shape
    C1 = params["conv1_w"].shape[0]
    C2 = params["conv2_w"].shape[0]
    HID = params["fc_w"].shape[0]
    HW = H * W

    B = _pick_block_batch(N)
    G = N // B

    # One-time repack of torch-layout params into per-tap matrices (tiny, constant
    # folds under jit; activations are never transposed anywhere).
    w1_taps = jnp.transpose(params["conv1_w"], (2, 3, 0, 1)).reshape(9, C1, CIN)
    w2_taps = jnp.transpose(params["conv2_w"], (2, 3, 0, 1)).reshape(9, C2, C1)
    b1_col = params["conv1_b"].reshape(C1, 1)
    b2_col = params["conv2_b"].reshape(C2, 1)
    wfc = params["fc_w"]                                   # (HID, C2), torch layout
    bfc_col = params["fc_b"].reshape(HID, 1)

    x_slab = x_nchw.reshape(N, CIN, HW)       # metadata reshape only (NCHW row-major)

    kern = functools.partial(_fused_backbone_kernel, B=B, H=H, W=W,
                             CIN=CIN, C1=C1, C2=C2, HID=HID)

    conv2_slab, pooled, fc = pl.pallas_call(
        kern,
        out_shape=(jax.ShapeDtypeStruct((N, C2, HW), jnp.float32),
                   jax.ShapeDtypeStruct((N, C2, 1), jnp.float32),
                   jax.ShapeDtypeStruct((N, HID, 1), jnp.float32)),
        grid=(G,),
        in_specs=[
            pl.BlockSpec((B, CIN, HW), lambda n: (n, 0, 0)),     # x slab (lane-dense)
            pl.BlockSpec((9, C1, CIN), lambda n: (0, 0, 0)),     # conv1 tap weights
            pl.BlockSpec((C1, 1), lambda n: (0, 0)),             # conv1 bias
            pl.BlockSpec((9, C2, C1), lambda n: (0, 0, 0)),      # conv2 tap weights
            pl.BlockSpec((C2, 1), lambda n: (0, 0)),             # conv2 bias
            pl.BlockSpec((HID, C2), lambda n: (0, 0)),           # fc weight
            pl.BlockSpec((HID, 1), lambda n: (0, 0)),            # fc bias
        ],
        out_specs=(
            pl.BlockSpec((B, C2, HW), lambda n: (n, 0, 0)),      # conv2 hook slab
            pl.BlockSpec((B, C2, 1), lambda n: (n, 0, 0)),       # avgpool hook
            pl.BlockSpec((B, HID, 1), lambda n: (n, 0, 0)),      # fc hook
        ),
        compiler_params=pltpu.CompilerParams(
            dimension_semantics=("parallel",)),   # >=2 steps -> both v7x TCs busy
    )(x_slab, w1_taps, b1_col, w2_taps, b2_col, wfc, bfc_col)

    # Pure metadata reshapes back to the torch hook shapes (no transposes).
    return {
        "conv2": conv2_slab.reshape(N, C2, H, W),
        "avgpool": pooled.reshape(N, C2, 1, 1),
        "fc": fc.reshape(N, HID),
    }


# ------------------------------ reference (JAX) ------------------------------

def _reference(x_nchw, params):
    dn = ("NCHW", "OIHW", "NCHW")
    c1 = lax.conv_general_dilated(x_nchw, params["conv1_w"], (1, 1), "SAME",
                                  dimension_numbers=dn)
    c1 = c1 + params["conv1_b"][None, :, None, None]
    h1 = jax.nn.relu(c1)
    c2 = lax.conv_general_dilated(h1, params["conv2_w"], (1, 1), "SAME",
                                  dimension_numbers=dn)
    c2 = c2 + params["conv2_b"][None, :, None, None]
    pooled = jnp.mean(jax.nn.relu(c2), axis=(2, 3))
    fc = pooled @ params["fc_w"].T + params["fc_b"]
    return {"conv2": c2, "avgpool": pooled[:, :, None, None], "fc": fc}


# ------------------------------------ main -----------------------------------

if __name__ == "__main__":
    N, CIN, H, W = 2, 4, 16, 16
    C1, C2, HID = 8, 16, 32

    key = jax.random.PRNGKey(0)
    k = jax.random.split(key, 6)
    x = jax.random.normal(k[0], (N, CIN, H, W), jnp.float32)

    # Deterministic synthetic params in PyTorch layouts.
    params = {
        "conv1_w": 0.1 * jax.random.normal(k[1], (C1, CIN, 3, 3), jnp.float32),
        "conv1_b": 0.1 * jax.random.normal(k[2], (C1,), jnp.float32),
        "conv2_w": 0.1 * jax.random.normal(k[3], (C2, C1, 3, 3), jnp.float32),
        "conv2_b": 0.1 * jax.random.normal(k[4], (C2,), jnp.float32),
        "fc_w": 0.1 * jax.random.normal(k[5], (HID, C2), jnp.float32),
        "fc_b": 0.05 * jnp.arange(HID, dtype=jnp.float32),
    }

    feats = jax.block_until_ready(
        jax.jit(feature_extractor_forward)(x, params))

    ref = _reference(x, params)
    for name in ("conv2", "avgpool", "fc"):
        assert feats[name].shape == ref[name].shape, name
        assert jnp.allclose(feats[name], ref[name], atol=2e-4, rtol=2e-4), \
            f"{name} mismatch"

    print("KERNEL_OK")
</pallas_src>

<mosaic_0001>
module attributes {stable_mosaic.version = 11 : i64} {
  func.func @_fused_backbone_kernel(%arg0: i32, %arg1: memref<1x4x256xf32, #tpu.memory_space<vmem>>, %arg2: memref<9x8x4xf32, #tpu.memory_space<vmem>>, %arg3: memref<8x1xf32, #tpu.memory_space<vmem>>, %arg4: memref<9x16x8xf32, #tpu.memory_space<vmem>>, %arg5: memref<16x1xf32, #tpu.memory_space<vmem>>, %arg6: memref<32x16xf32, #tpu.memory_space<vmem>>, %arg7: memref<32x1xf32, #tpu.memory_space<vmem>>, %arg8: memref<1x16x256xf32, #tpu.memory_space<vmem>>, %arg9: memref<1x16x1xf32, #tpu.memory_space<vmem>>, %arg10: memref<1x32x1xf32, #tpu.memory_space<vmem>>) attributes {dimension_semantics = [#tpu.dimension_semantics<parallel>], iteration_bounds = array<i64: 2>, scalar_prefetch = 0 : i64, scratch_operands = 0 : i64, tpu.core_type = #tpu.core_type<tc>, window_params = [{transform_indices = @transform_0, window_bounds = array<i64: 1, 4, 256>}, {pipeline_mode = #tpu.pipeline_mode<synchronous>, transform_indices = @transform_1, window_bounds = array<i64: 9, 8, 4>}, {pipeline_mode = #tpu.pipeline_mode<synchronous>, transform_indices = @transform_2, window_bounds = array<i64: 8, 1>}, {pipeline_mode = #tpu.pipeline_mode<synchronous>, transform_indices = @transform_3, window_bounds = array<i64: 9, 16, 8>}, {pipeline_mode = #tpu.pipeline_mode<synchronous>, transform_indices = @transform_4, window_bounds = array<i64: 16, 1>}, {pipeline_mode = #tpu.pipeline_mode<synchronous>, transform_indices = @transform_5, window_bounds = array<i64: 32, 16>}, {pipeline_mode = #tpu.pipeline_mode<synchronous>, transform_indices = @transform_6, window_bounds = array<i64: 32, 1>}, {transform_indices = @transform_7, window_bounds = array<i64: 1, 16, 256>}, {transform_indices = @transform_8, window_bounds = array<i64: 1, 16, 1>}, {transform_indices = @transform_9, window_bounds = array<i64: 1, 32, 1>}]} {
    %c0 = arith.constant 0 : index
    %c0_0 = arith.constant 0 : index
    %c0_1 = arith.constant 0 : index
    %0 = vector.load %arg1[%c0, %c0_0, %c0_1] : memref<1x4x256xf32, #tpu.memory_space<vmem>>, vector<1x4x256xf32>
    %1 = vector.shape_cast %0 : vector<1x4x256xf32> to vector<4x256xf32>
    %2 = tpu.iota {dimensions = array<i32: 1>} : vector<4x256xi32>
    %c16_i32 = arith.constant 16 : i32
    %c0_i32 = arith.constant 0 : i32
    %3 = arith.cmpi eq, %c16_i32, %c0_i32 : i32
    %c1_i32 = arith.constant 1 : i32
    %4 = arith.select %3, %c1_i32, %c16_i32 : i32
    %5 = vector.broadcast %4 : i32 to vector<4x256xi32>
    %6 = arith.remsi %2, %5 : vector<4x256xi32>
    %c0_i32_2 = arith.constant 0 : i32
    %7 = vector.broadcast %c0_i32_2 : i32 to vector<4x256xi32>
    %8 = arith.cmpi ne, %6, %7 : vector<4x256xi32>
    %c0_i32_3 = arith.constant 0 : i32
    %9 = vector.broadcast %c0_i32_3 : i32 to vector<4x256xi32>
    %10 = arith.cmpi slt, %6, %9 : vector<4x256xi32>
    %c0_i32_4 = arith.constant 0 : i32
    %11 = arith.cmpi slt, %4, %c0_i32_4 : i32
    %12 = vector.broadcast %11 : i1 to vector<4x256xi1>
    %13 = vector.broadcast %12 : vector<4x256xi1> to vector<4x256xi1>
    %14 = arith.xori %10, %13 : vector<4x256xi1>
    %15 = arith.andi %14, %8 : vector<4x256xi1>
    %16 = vector.broadcast %4 : i32 to vector<4x256xi32>
    %17 = arith.addi %6, %16 : vector<4x256xi32>
    %18 = arith.select %15, %17, %6 : vector<4x256xi1>, vector<4x256xi32>
    %c0_i32_5 = arith.constant 0 : i32
    %19 = vector.broadcast %c0_i32_5 : i32 to vector<4x256xi32>
    %20 = arith.cmpi sgt, %18, %19 : vector<4x256xi32>
    %c15_i32 = arith.constant 15 : i32
    %21 = vector.broadcast %c15_i32 : i32 to vector<4x256xi32>
    %22 = arith.cmpi slt, %18, %21 : vector<4x256xi32>
    %cst = arith.constant 0.000000e+00 : f32
    %23 = vector.broadcast %cst : f32 to vector<4x128xf32>
    %24 = tpu.concatenate %23, %1, %23 in 1 : vector<4x128xf32>, vector<4x256xf32>, vector<4x128xf32> -> vector<4x512xf32>
    %25 = vector.extract_strided_slice %24 {offsets = [0, 111], sizes = [4, 256], strides = [1, 1]} : vector<4x512xf32> to vector<4x256xf32>
    %cst_6 = arith.constant 0.000000e+00 : f32
    %26 = vector.broadcast %cst_6 : f32 to vector<4x256xf32>
    %27 = arith.select %20, %25, %26 : vector<4x256xi1>, vector<4x256xf32>
    %c0_7 = arith.constant 0 : index
    %c0_8 = arith.constant 0 : index
    %c0_9 = arith.constant 0 : index
    %28 = vector.load %arg2[%c0_7, %c0_8, %c0_9] : memref<9x8x4xf32, #tpu.memory_space<vmem>>, vector<1x8x4xf32>
    %29 = vector.shape_cast %28 : vector<1x8x4xf32> to vector<8x4xf32>
    %cst_10 = arith.constant dense<0.000000e+00> : vector<8x256xf32>
    %30 = tpu.matmul %29, %27, %cst_10 {dimension_numbers = #tpu.dot_dimension_numbers<[1], [0], [0], [1], [0, 0, 1, 1], [], []>} : vector<8x4xf32>, vector<4x256xf32>, vector<8x256xf32> -> vector<8x256xf32>
    %31 = vector.extract_strided_slice %24 {offsets = [0, 112], sizes = [4, 256], strides = [1, 1]} : vector<4x512xf32> to vector<4x256xf32>
    %c1 = arith.constant 1 : index
    %c0_11 = arith.constant 0 : index
    %c0_12 = arith.constant 0 : index
    %32 = vector.load %arg2[%c1, %c0_11, %c0_12] : memref<9x8x4xf32, #tpu.memory_space<vmem>>, vector<1x8x4xf32>
    %33 = vector.shape_cast %32 : vector<1x8x4xf32> to vector<8x4xf32>
    %cst_13 = arith.constant dense<0.000000e+00> : vector<8x256xf32>
    %34 = tpu.matmul %33, %31, %cst_13 {dimension_numbers = #tpu.dot_dimension_numbers<[1], [0], [0], [1], [0, 0, 1, 1], [], []>} : vector<8x4xf32>, vector<4x256xf32>, vector<8x256xf32> -> vector<8x256xf32>
    %35 = arith.addf %30, %34 : vector<8x256xf32>
    %36 = vector.extract_strided_slice %24 {offsets = [0, 113], sizes = [4, 256], strides = [1, 1]} : vector<4x512xf32> to vector<4x256xf32>
    %cst_14 = arith.constant 0.000000e+00 : f32
    %37 = vector.broadcast %cst_14 : f32 to vector<4x256xf32>
    %38 = arith.select %22, %36, %37 : vector<4x256xi1>, vector<4x256xf32>
    %c2 = arith.constant 2 : index
    %c0_15 = arith.constant 0 : index
    %c0_16 = arith.constant 0 : index
    %39 = vector.load %arg2[%c2, %c0_15, %c0_16] : memref<9x8x4xf32, #tpu.memory_space<vmem>>, vector<1x8x4xf32>
    %40 = vector.shape_cast %39 : vector<1x8x4xf32> to vector<8x4xf32>
    %cst_17 = arith.constant dense<0.000000e+00> : vector<8x256xf32>
    %41 = tpu.matmul %40, %38, %cst_17 {dimension_numbers = #tpu.dot_dimension_numbers<[1], [0], [0], [1], [0, 0, 1, 1], [], []>} : vector<8x4xf32>, vector<4x256xf32>, vector<8x256xf32> -> vector<8x256xf32>
    %42 = arith.addf %35, %41 : vector<8x256xf32>
    %43 = vector.extract_strided_slice %24 {offsets = [0, 127], sizes = [4, 256], strides = [1, 1]} : vector<4x512xf32> to vector<4x256xf32>
    %cst_18 = arith.constant 0.000000e+00 : f32
    %44 = vector.broadcast %cst_18 : f32 to vector<4x256xf32>
    %45 = arith.select %20, %43, %44 : vector<4x256xi1>, vector<4x256xf32>
    %c3 = arith.constant 3 : index
    %c0_19 = arith.constant 0 : index
    %c0_20 = arith.constant 0 : index
    %46 = vector.load %arg2[%c3, %c0_19, %c0_20] : memref<9x8x4xf32, #tpu.memory_space<vmem>>, vector<1x8x4xf32>
    %47 = vector.shape_cast %46 : vector<1x8x4xf32> to vector<8x4xf32>
    %cst_21 = arith.constant dense<0.000000e+00> : vector<8x256xf32>
    %48 = tpu.matmul %47, %45, %cst_21 {dimension_numbers = #tpu.dot_dimension_numbers<[1], [0], [0], [1], [0, 0, 1, 1], [], []>} : vector<8x4xf32>, vector<4x256xf32>, vector<8x256xf32> -> vector<8x256xf32>
    %49 = arith.addf %42, %48 : vector<8x256xf32>
    %50 = vector.extract_strided_slice %24 {offsets = [0, 128], sizes = [4, 256], strides = [1, 1]} : vector<4x512xf32> to vector<4x256xf32>
    %c4 = arith.constant 4 : index
    %c0_22 = arith.constant 0 : index
    %c0_23 = arith.constant 0 : index
    %51 = vector.load %arg2[%c4, %c0_22, %c0_23] : memref<9x8x4xf32, #tpu.memory_space<vmem>>, vector<1x8x4xf32>
    %52 = vector.shape_cast %51 : vector<1x8x4xf32> to vector<8x4xf32>
    %cst_24 = arith.constant dense<0.000000e+00> : vector<8x256xf32>
    %53 = tpu.matmul %52, %50, %cst_24 {dimension_numbers = #tpu.dot_dimension_numbers<[1], [0], [0], [1], [0, 0, 1, 1], [], []>} : vector<8x4xf32>, vector<4x256xf32>, vector<8x256xf32> -> vector<8x256xf32>
    %54 = arith.addf %49, %53 : vector<8x256xf32>
    %55 = vector.extract_strided_slice %24 {offsets = [0, 129], sizes = [4, 256], strides = [1, 1]} : vector<4x512xf32> to vector<4x256xf32>
    %cst_25 = arith.constant 0.000000e+00 : f32
    %56 = vector.broadcast %cst_25 : f32 to vector<4x256xf32>
    %57 = arith.select %22, %55, %56 : vector<4x256xi1>, vector<4x256xf32>
    %c5 = arith.constant 5 : index
    %c0_26 = arith.constant 0 : index
    %c0_27 = arith.constant 0 : index
    %58 = vector.load %arg2[%c5, %c0_26, %c0_27] : memref<9x8x4xf32, #tpu.memory_space<vmem>>, vector<1x8x4xf32>
    %59 = vector.shape_cast %58 : vector<1x8x4xf32> to vector<8x4xf32>
    %cst_28 = arith.constant dense<0.000000e+00> : vector<8x256xf32>
    %60 = tpu.matmul %59, %57, %cst_28 {dimension_numbers = #tpu.dot_dimension_numbers<[1], [0], [0], [1], [0, 0, 1, 1], [], []>} : vector<8x4xf32>, vector<4x256xf32>, vector<8x256xf32> -> vector<8x256xf32>
    %61 = arith.addf %54, %60 : vector<8x256xf32>
    %62 = vector.extract_strided_slice %24 {offsets = [0, 143], sizes = [4, 256], strides = [1, 1]} : vector<4x512xf32> to vector<4x256xf32>
    %cst_29 = arith.constant 0.000000e+00 : f32
    %63 = vector.broadcast %cst_29 : f32 to vector<4x256xf32>
    %64 = arith.select %20, %62, %63 : vector<4x256xi1>, vector<4x256xf32>
    %c6 = arith.constant 6 : index
    %c0_30 = arith.constant 0 : index
    %c0_31 = arith.constant 0 : index
    %65 = vector.load %arg2[%c6, %c0_30, %c0_31] : memref<9x8x4xf32, #tpu.memory_space<vmem>>, vector<1x8x4xf32>
    %66 = vector.shape_cast %65 : vector<1x8x4xf32> to vector<8x4xf32>
    %cst_32 = arith.constant dense<0.000000e+00> : vector<8x256xf32>
    %67 = tpu.matmul %66, %64, %cst_32 {dimension_numbers = #tpu.dot_dimension_numbers<[1], [0], [0], [1], [0, 0, 1, 1], [], []>} : vector<8x4xf32>, vector<4x256xf32>, vector<8x256xf32> -> vector<8x256xf32>
    %68 = arith.addf %61, %67 : vector<8x256xf32>
    %69 = vector.extract_strided_slice %24 {offsets = [0, 144], sizes = [4, 256], strides = [1, 1]} : vector<4x512xf32> to vector<4x256xf32>
    %c7 = arith.constant 7 : index
    %c0_33 = arith.constant 0 : index
    %c0_34 = arith.constant 0 : index
    %70 = vector.load %arg2[%c7, %c0_33, %c0_34] : memref<9x8x4xf32, #tpu.memory_space<vmem>>, vector<1x8x4xf32>
    %71 = vector.shape_cast %70 : vector<1x8x4xf32> to vector<8x4xf32>
    %cst_35 = arith.constant dense<0.000000e+00> : vector<8x256xf32>
    %72 = tpu.matmul %71, %69, %cst_35 {dimension_numbers = #tpu.dot_dimension_numbers<[1], [0], [0], [1], [0, 0, 1, 1], [], []>} : vector<8x4xf32>, vector<4x256xf32>, vector<8x256xf32> -> vector<8x256xf32>
    %73 = arith.addf %68, %72 : vector<8x256xf32>
    %74 = vector.extract_strided_slice %24 {offsets = [0, 145], sizes = [4, 256], strides = [1, 1]} : vector<4x512xf32> to vector<4x256xf32>
    %cst_36 = arith.constant 0.000000e+00 : f32
    %75 = vector.broadcast %cst_36 : f32 to vector<4x256xf32>
    %76 = arith.select %22, %74, %75 : vector<4x256xi1>, vector<4x256xf32>
    %c8 = arith.constant 8 : index
    %c0_37 = arith.constant 0 : index
    %c0_38 = arith.constant 0 : index
    %77 = vector.load %arg2[%c8, %c0_37, %c0_38] : memref<9x8x4xf32, #tpu.memory_space<vmem>>, vector<1x8x4xf32>
    %78 = vector.shape_cast %77 : vector<1x8x4xf32> to vector<8x4xf32>
    %cst_39 = arith.constant dense<0.000000e+00> : vector<8x256xf32>
    %79 = tpu.matmul %78, %76, %cst_39 {dimension_numbers = #tpu.dot_dimension_numbers<[1], [0], [0], [1], [0, 0, 1, 1], [], []>} : vector<8x4xf32>, vector<4x256xf32>, vector<8x256xf32> -> vector<8x256xf32>
    %80 = arith.addf %73, %79 : vector<8x256xf32>
    %c0_40 = arith.constant 0 : index
    %c0_41 = arith.constant 0 : index
    %81 = vector.load %arg3[%c0_40, %c0_41] : memref<8x1xf32, #tpu.memory_space<vmem>>, vector<8x1xf32>
    %82 = vector.broadcast %81 : vector<8x1xf32> to vector<8x256xf32>
    %83 = arith.addf %80, %82 : vector<8x256xf32>
    %cst_42 = arith.constant 0.000000e+00 : f32
    %84 = vector.broadcast %cst_42 : f32 to vector<8x256xf32>
    %85 = arith.maximumf %83, %84 : vector<8x256xf32>
    %86 = tpu.iota {dimensions = array<i32: 1>} : vector<8x256xi32>
    %c16_i32_43 = arith.constant 16 : i32
    %c0_i32_44 = arith.constant 0 : i32
    %87 = arith.cmpi eq, %c16_i32_43, %c0_i32_44 : i32
    %c1_i32_45 = arith.constant 1 : i32
    %88 = arith.select %87, %c1_i32_45, %c16_i32_43 : i32
    %89 = vector.broadcast %88 : i32 to vector<8x256xi32>
    %90 = arith.remsi %86, %89 : vector<8x256xi32>
    %c0_i32_46 = arith.constant 0 : i32
    %91 = vector.broadcast %c0_i32_46 : i32 to vector<8x256xi32>
    %92 = arith.cmpi ne, %90, %91 : vector<8x256xi32>
    %c0_i32_47 = arith.constant 0 : i32
    %93 = vector.broadcast %c0_i32_47 : i32 to vector<8x256xi32>
    %94 = arith.cmpi slt, %90, %93 : vector<8x256xi32>
    %c0_i32_48 = arith.constant 0 : i32
    %95 = arith.cmpi slt, %88, %c0_i32_48 : i32
    %96 = vector.broadcast %95 : i1 to vector<8x256xi1>
    %97 = vector.broadcast %96 : vector<8x256xi1> to vector<8x256xi1>
    %98 = arith.xori %94, %97 : vector<8x256xi1>
    %99 = arith.andi %98, %92 : vector<8x256xi1>
    %100 = vector.broadcast %88 : i32 to vector<8x256xi32>
    %101 = arith.addi %90, %100 : vector<8x256xi32>
    %102 = arith.select %99, %101, %90 : vector<8x256xi1>, vector<8x256xi32>
    %c0_i32_49 = arith.constant 0 : i32
    %103 = vector.broadcast %c0_i32_49 : i32 to vector<8x256xi32>
    %104 = arith.cmpi sgt, %102, %103 : vector<8x256xi32>
    %c15_i32_50 = arith.constant 15 : i32
    %105 = vector.broadcast %c15_i32_50 : i32 to vector<8x256xi32>
    %106 = arith.cmpi slt, %102, %105 : vector<8x256xi32>
    %cst_51 = arith.constant 0.000000e+00 : f32
    %107 = vector.broadcast %cst_51 : f32 to vector<8x128xf32>
    %108 = tpu.concatenate %107, %85, %107 in 1 : vector<8x128xf32>, vector<8x256xf32>, vector<8x128xf32> -> vector<8x512xf32>
    %109 = vector.extract_strided_slice %108 {offsets = [0, 111], sizes = [8, 256], strides = [1, 1]} : vector<8x512xf32> to vector<8x256xf32>
    %cst_52 = arith.constant 0.000000e+00 : f32
    %110 = vector.broadcast %cst_52 : f32 to vector<8x256xf32>
    %111 = arith.select %104, %109, %110 : vector<8x256xi1>, vector<8x256xf32>
    %c0_53 = arith.constant 0 : index
    %c0_54 = arith.constant 0 : index
    %c0_55 = arith.constant 0 : index
    %112 = vector.load %arg4[%c0_53, %c0_54, %c0_55] : memref<9x16x8xf32, #tpu.memory_space<vmem>>, vector<1x16x8xf32>
    %113 = vector.shape_cast %112 : vector<1x16x8xf32> to vector<16x8xf32>
    %cst_56 = arith.constant dense<0.000000e+00> : vector<16x256xf32>
    %114 = tpu.matmul %113, %111, %cst_56 {dimension_numbers = #tpu.dot_dimension_numbers<[1], [0], [0], [1], [0, 0, 1, 1], [], []>} : vector<16x8xf32>, vector<8x256xf32>, vector<16x256xf32> -> vector<16x256xf32>
    %115 = vector.extract_strided_slice %108 {offsets = [0, 112], sizes = [8, 256], strides = [1, 1]} : vector<8x512xf32> to vector<8x256xf32>
    %c1_57 = arith.constant 1 : index
    %c0_58 = arith.constant 0 : index
    %c0_59 = arith.constant 0 : index
    %116 = vector.load %arg4[%c1_57, %c0_58, %c0_59] : memref<9x16x8xf32, #tpu.memory_space<vmem>>, vector<1x16x8xf32>
    %117 = vector.shape_cast %116 : vector<1x16x8xf32> to vector<16x8xf32>
    %cst_60 = arith.constant dense<0.000000e+00> : vector<16x256xf32>
    %118 = tpu.matmul %117, %115, %cst_60 {dimension_numbers = #tpu.dot_dimension_numbers<[1], [0], [0], [1], [0, 0, 1, 1], [], []>} : vector<16x8xf32>, vector<8x256xf32>, vector<16x256xf32> -> vector<16x256xf32>
    %119 = arith.addf %114, %118 : vector<16x256xf32>
    %120 = vector.extract_strided_slice %108 {offsets = [0, 113], sizes = [8, 256], strides = [1, 1]} : vector<8x512xf32> to vector<8x256xf32>
    %cst_61 = arith.constant 0.000000e+00 : f32
    %121 = vector.broadcast %cst_61 : f32 to vector<8x256xf32>
    %122 = arith.select %106, %120, %121 : vector<8x256xi1>, vector<8x256xf32>
    %c2_62 = arith.constant 2 : index
    %c0_63 = arith.constant 0 : index
    %c0_64 = arith.constant 0 : index
    %123 = vector.load %arg4[%c2_62, %c0_63, %c0_64] : memref<9x16x8xf32, #tpu.memory_space<vmem>>, vector<1x16x8xf32>
    %124 = vector.shape_cast %123 : vector<1x16x8xf32> to vector<16x8xf32>
    %cst_65 = arith.constant dense<0.000000e+00> : vector<16x256xf32>
    %125 = tpu.matmul %124, %122, %cst_65 {dimension_numbers = #tpu.dot_dimension_numbers<[1], [0], [0], [1], [0, 0, 1, 1], [], []>} : vector<16x8xf32>, vector<8x256xf32>, vector<16x256xf32> -> vector<16x256xf32>
    %126 = arith.addf %119, %125 : vector<16x256xf32>
    %127 = vector.extract_strided_slice %108 {offsets = [0, 127], sizes = [8, 256], strides = [1, 1]} : vector<8x512xf32> to vector<8x256xf32>
    %cst_66 = arith.constant 0.000000e+00 : f32
    %128 = vector.broadcast %cst_66 : f32 to vector<8x256xf32>
    %129 = arith.select %104, %127, %128 : vector<8x256xi1>, vector<8x256xf32>
    %c3_67 = arith.constant 3 : index
    %c0_68 = arith.constant 0 : index
    %c0_69 = arith.constant 0 : index
    %130 = vector.load %arg4[%c3_67, %c0_68, %c0_69] : memref<9x16x8xf32, #tpu.memory_space<vmem>>, vector<1x16x8xf32>
    %131 = vector.shape_cast %130 : vector<1x16x8xf32> to vector<16x8xf32>
    %cst_70 = arith.constant dense<0.000000e+00> : vector<16x256xf32>
    %132 = tpu.matmul %131, %129, %cst_70 {dimension_numbers = #tpu.dot_dimension_numbers<[1], [0], [0], [1], [0, 0, 1, 1], [], []>} : vector<16x8xf32>, vector<8x256xf32>, vector<16x256xf32> -> vector<16x256xf32>
    %133 = arith.addf %126, %132 : vector<16x256xf32>
    %134 = vector.extract_strided_slice %108 {offsets = [0, 128], sizes = [8, 256], strides = [1, 1]} : vector<8x512xf32> to vector<8x256xf32>
    %c4_71 = arith.constant 4 : index
    %c0_72 = arith.constant 0 : index
    %c0_73 = arith.constant 0 : index
    %135 = vector.load %arg4[%c4_71, %c0_72, %c0_73] : memref<9x16x8xf32, #tpu.memory_space<vmem>>, vector<1x16x8xf32>
    %136 = vector.shape_cast %135 : vector<1x16x8xf32> to vector<16x8xf32>
    %cst_74 = arith.constant dense<0.000000e+00> : vector<16x256xf32>
    %137 = tpu.matmul %136, %134, %cst_74 {dimension_numbers = #tpu.dot_dimension_numbers<[1], [0], [0], [1], [0, 0, 1, 1], [], []>} : vector<16x8xf32>, vector<8x256xf32>, vector<16x256xf32> -> vector<16x256xf32>
    %138 = arith.addf %133, %137 : vector<16x256xf32>
    %139 = vector.extract_strided_slice %108 {offsets = [0, 129], sizes = [8, 256], strides = [1, 1]} : vector<8x512xf32> to vector<8x256xf32>
    %cst_75 = arith.constant 0.000000e+00 : f32
    %140 = vector.broadcast %cst_75 : f32 to vector<8x256xf32>
    %141 = arith.select %106, %139, %140 : vector<8x256xi1>, vector<8x256xf32>
    %c5_76 = arith.constant 5 : index
    %c0_77 = arith.constant 0 : index
    %c0_78 = arith.constant 0 : index
    %142 = vector.load %arg4[%c5_76, %c0_77, %c0_78] : memref<9x16x8xf32, #tpu.memory_space<vmem>>, vector<1x16x8xf32>
    %143 = vector.shape_cast %142 : vector<1x16x8xf32> to vector<16x8xf32>
    %cst_79 = arith.constant dense<0.000000e+00> : vector<16x256xf32>
    %144 = tpu.matmul %143, %141, %cst_79 {dimension_numbers = #tpu.dot_dimension_numbers<[1], [0], [0], [1], [0, 0, 1, 1], [], []>} : vector<16x8xf32>, vector<8x256xf32>, vector<16x256xf32> -> vector<16x256xf32>
    %145 = arith.addf %138, %144 : vector<16x256xf32>
    %146 = vector.extract_strided_slice %108 {offsets = [0, 143], sizes = [8, 256], strides = [1, 1]} : vector<8x512xf32> to vector<8x256xf32>
    %cst_80 = arith.constant 0.000000e+00 : f32
    %147 = vector.broadcast %cst_80 : f32 to vector<8x256xf32>
    %148 = arith.select %104, %146, %147 : vector<8x256xi1>, vector<8x256xf32>
    %c6_81 = arith.constant 6 : index
    %c0_82 = arith.constant 0 : index
    %c0_83 = arith.constant 0 : index
    %149 = vector.load %arg4[%c6_81, %c0_82, %c0_83] : memref<9x16x8xf32, #tpu.memory_space<vmem>>, vector<1x16x8xf32>
    %150 = vector.shape_cast %149 : vector<1x16x8xf32> to vector<16x8xf32>
    %cst_84 = arith.constant dense<0.000000e+00> : vector<16x256xf32>
    %151 = tpu.matmul %150, %148, %cst_84 {dimension_numbers = #tpu.dot_dimension_numbers<[1], [0], [0], [1], [0, 0, 1, 1], [], []>} : vector<16x8xf32>, vector<8x256xf32>, vector<16x256xf32> -> vector<16x256xf32>
    %152 = arith.addf %145, %151 : vector<16x256xf32>
    %153 = vector.extract_strided_slice %108 {offsets = [0, 144], sizes = [8, 256], strides = [1, 1]} : vector<8x512xf32> to vector<8x256xf32>
    %c7_85 = arith.constant 7 : index
    %c0_86 = arith.constant 0 : index
    %c0_87 = arith.constant 0 : index
    %154 = vector.load %arg4[%c7_85, %c0_86, %c0_87] : memref<9x16x8xf32, #tpu.memory_space<vmem>>, vector<1x16x8xf32>
    %155 = vector.shape_cast %154 : vector<1x16x8xf32> to vector<16x8xf32>
    %cst_88 = arith.constant dense<0.000000e+00> : vector<16x256xf32>
    %156 = tpu.matmul %155, %153, %cst_88 {dimension_numbers = #tpu.dot_dimension_numbers<[1], [0], [0], [1], [0, 0, 1, 1], [], []>} : vector<16x8xf32>, vector<8x256xf32>, vector<16x256xf32> -> vector<16x256xf32>
    %157 = arith.addf %152, %156 : vector<16x256xf32>
    %158 = vector.extract_strided_slice %108 {offsets = [0, 145], sizes = [8, 256], strides = [1, 1]} : vector<8x512xf32> to vector<8x256xf32>
    %cst_89 = arith.constant 0.000000e+00 : f32
    %159 = vector.broadcast %cst_89 : f32 to vector<8x256xf32>
    %160 = arith.select %106, %158, %159 : vector<8x256xi1>, vector<8x256xf32>
    %c8_90 = arith.constant 8 : index
    %c0_91 = arith.constant 0 : index
    %c0_92 = arith.constant 0 : index
    %161 = vector.load %arg4[%c8_90, %c0_91, %c0_92] : memref<9x16x8xf32, #tpu.memory_space<vmem>>, vector<1x16x8xf32>
    %162 = vector.shape_cast %161 : vector<1x16x8xf32> to vector<16x8xf32>
    %cst_93 = arith.constant dense<0.000000e+00> : vector<16x256xf32>
    %163 = tpu.matmul %162, %160, %cst_93 {dimension_numbers = #tpu.dot_dimension_numbers<[1], [0], [0], [1], [0, 0, 1, 1], [], []>} : vector<16x8xf32>, vector<8x256xf32>, vector<16x256xf32> -> vector<16x256xf32>
    %164 = arith.addf %157, %163 : vector<16x256xf32>
    %c0_94 = arith.constant 0 : index
    %c0_95 = arith.constant 0 : index
    %165 = vector.load %arg5[%c0_94, %c0_95] : memref<16x1xf32, #tpu.memory_space<vmem>>, vector<16x1xf32>
    %166 = vector.broadcast %165 : vector<16x1xf32> to vector<16x256xf32>
    %167 = arith.addf %164, %166 : vector<16x256xf32>
    %c0_96 = arith.constant 0 : index
    %c0_97 = arith.constant 0 : index
    %c0_98 = arith.constant 0 : index
    %168 = vector.load %arg8[%c0_96, %c0_97, %c0_98] : memref<1x16x256xf32, #tpu.memory_space<vmem>>, vector<1x16x256xf32>
    %169 = vector.shape_cast %168 : vector<1x16x256xf32> to vector<16x256xf32>
    %170 = vector.shape_cast %167 : vector<16x256xf32> to vector<1x16x256xf32>
    tpu.vector_store %arg8[%c0_96, %c0_97, %c0_98], %170 {strides = array<i32>} : memref<1x16x256xf32, #tpu.memory_space<vmem>>, vector<1x16x256xf32>,
    %cst_99 = arith.constant 0.000000e+00 : f32
    %171 = vector.broadcast %cst_99 : f32 to vector<16x256xf32>
    %172 = arith.maximumf %167, %171 : vector<16x256xf32>
    %cst_100 = arith.constant dense<0.000000e+00> : vector<16xf32>
    %173 = vector.multi_reduction <add>, %172, %cst_100 [1] : vector<16x256xf32> to vector<16xf32>
    %174 = vector.shape_cast %173 : vector<16xf32> to vector<16x1xf32>
    %cst_101 = arith.constant 3.906250e-03 : f32
    %175 = vector.broadcast %cst_101 : f32 to vector<16x1xf32>
    %176 = arith.mulf %174, %175 : vector<16x1xf32>
    %c0_102 = arith.constant 0 : index
    %c0_103 = arith.constant 0 : index
    %c0_104 = arith.constant 0 : index
    %177 = vector.load %arg9[%c0_102, %c0_103, %c0_104] : memref<1x16x1xf32, #tpu.memory_space<vmem>>, vector<1x16x1xf32>
    %178 = vector.shape_cast %177 : vector<1x16x1xf32> to vector<16x1xf32>
    %179 = vector.shape_cast %176 : vector<16x1xf32> to vector<1x16x1xf32>
    tpu.vector_store %arg9[%c0_102, %c0_103, %c0_104], %179 {strides = array<i32>} : memref<1x16x1xf32, #tpu.memory_space<vmem>>, vector<1x16x1xf32>,
    %c0_105 = arith.constant 0 : index
    %c0_106 = arith.constant 0 : index
    %180 = vector.load %arg6[%c0_105, %c0_106] : memref<32x16xf32, #tpu.memory_space<vmem>>, vector<32x16xf32>
    %cst_107 = arith.constant dense<0.000000e+00> : vector<32x1xf32>
    %181 = tpu.matmul %180, %176, %cst_107 {dimension_numbers = #tpu.dot_dimension_numbers<[1], [0], [0], [1], [0, 0, 1, 1], [], []>} : vector<32x16xf32>, vector<16x1xf32>, vector<32x1xf32> -> vector<32x1xf32>
    %c0_108 = arith.constant 0 : index
    %c0_109 = arith.constant 0 : index
    %182 = vector.load %arg7[%c0_108, %c0_109] : memref<32x1xf32, #tpu.memory_space<vmem>>, vector<32x1xf32>
    %183 = arith.addf %181, %182 : vector<32x1xf32>
    %c0_110 = arith.constant 0 : index
    %c0_111 = arith.constant 0 : index
    %c0_112 = arith.constant 0 : index
    %184 = vector.load %arg10[%c0_110, %c0_111, %c0_112] : memref<1x32x1xf32, #tpu.memory_space<vmem>>, vector<1x32x1xf32>
    %185 = vector.shape_cast %184 : vector<1x32x1xf32> to vector<32x1xf32>
    %186 = vector.shape_cast %183 : vector<32x1xf32> to vector<1x32x1xf32>
    tpu.vector_store %arg10[%c0_110, %c0_111, %c0_112], %186 {strides = array<i32>} : memref<1x32x1xf32, #tpu.memory_space<vmem>>, vector<1x32x1xf32>,
    return
  }
  func.func @transform_0(%arg0: i32) -> (i32, i32, i32) {
    %c0_i32 = arith.constant 0 : i32
    %c0_i32_0 = arith.constant 0 : i32
    %c0_i32_1 = arith.constant 0 : i32
    return %arg0, %c0_i32, %c0_i32_0 : i32, i32, i32
  }
  func.func @transform_1(%arg0: i32) -> (i32, i32, i32) {
    %c0_i32 = arith.constant 0 : i32
    %c0_i32_0 = arith.constant 0 : i32
    %c0_i32_1 = arith.constant 0 : i32
    %c0_i32_2 = arith.constant 0 : i32
    return %c0_i32, %c0_i32_0, %c0_i32_1 : i32, i32, i32
  }
  func.func @transform_2(%arg0: i32) -> (i32, i32) {
    %c0_i32 = arith.constant 0 : i32
    %c0_i32_0 = arith.constant 0 : i32
    %c0_i32_1 = arith.constant 0 : i32
    return %c0_i32, %c0_i32_0 : i32, i32
  }
  func.func @transform_3(%arg0: i32) -> (i32, i32, i32) {
    %c0_i32 = arith.constant 0 : i32
    %c0_i32_0 = arith.constant 0 : i32
    %c0_i32_1 = arith.constant 0 : i32
    %c0_i32_2 = arith.constant 0 : i32
    return %c0_i32, %c0_i32_0, %c0_i32_1 : i32, i32, i32
  }
  func.func @transform_4(%arg0: i32) -> (i32, i32) {
    %c0_i32 = arith.constant 0 : i32
    %c0_i32_0 = arith.constant 0 : i32
    %c0_i32_1 = arith.constant 0 : i32
    return %c0_i32, %c0_i32_0 : i32, i32
  }
  func.func @transform_5(%arg0: i32) -> (i32, i32) {
    %c0_i32 = arith.constant 0 : i32
    %c0_i32_0 = arith.constant 0 : i32
    %c0_i32_1 = arith.constant 0 : i32
    return %c0_i32, %c0_i32_0 : i32, i32
  }
  func.func @transform_6(%arg0: i32) -> (i32, i32) {
    %c0_i32 = arith.constant 0 : i32
    %c0_i32_0 = arith.constant 0 : i32
    %c0_i32_1 = arith.constant 0 : i32
    return %c0_i32, %c0_i32_0 : i32, i32
  }
  func.func @transform_7(%arg0: i32) -> (i32, i32, i32) {
    %c0_i32 = arith.constant 0 : i32
    %c0_i32_0 = arith.constant 0 : i32
    %c0_i32_1 = arith.constant 0 : i32
    return %arg0, %c0_i32, %c0_i32_0 : i32, i32, i32
  }
  func.func @transform_8(%arg0: i32) -> (i32, i32, i32) {
    %c0_i32 = arith.constant 0 : i32
    %c0_i32_0 = arith.constant 0 : i32
    %c0_i32_1 = arith.constant 0 : i32
    return %arg0, %c0_i32, %c0_i32_0 : i32, i32, i32
  }
  func.func @transform_9(%arg0: i32) -> (i32, i32, i32) {
    %c0_i32 = arith.constant 0 : i32
    %c0_i32_0 = arith.constant 0 : i32
    %c0_i32_1 = arith.constant 0 : i32
    return %arg0, %c0_i32, %c0_i32_0 : i32, i32, i32
  }
}

</mosaic_0001>

<llo_original>
// kernel: feature_extractor_forward.1
$region0: #{feature_extractor_forward.1}
  #allocation0 [shape = 'u32[]', space=smem, size = 0x4, offset = 0x4, fixed_abs, tag = 'smem constant byte address 0x4 - core index']
  #allocation1 [shape = 'u32[144,128]{1,0:T(1,128)}', space=vmem, size = 0x12000, scoped, tag = 'internal scratch']
  %s0 = inlined_call_operand.vmem [shape: f32[2,4,256], index: 0, kind: input, shape index: {}]
  %s1 = inlined_call_operand.vmem [shape: f32[9,8,4], index: 1, kind: input, shape index: {}]
  %s2 = inlined_call_operand.vmem [shape: f32[8,1], index: 2, kind: input, shape index: {}]
  %s3 = inlined_call_operand.vmem [shape: f32[9,16,8], index: 3, kind: input, shape index: {}]
  %s4 = inlined_call_operand.vmem [shape: f32[16,1], index: 4, kind: input, shape index: {}]
  %s5 = inlined_call_operand.vmem [shape: f32[32,16], index: 5, kind: input, shape index: {}]
  %s6 = inlined_call_operand.vmem [shape: f32[32,1], index: 6, kind: input, shape index: {}]
  %s7 = inlined_call_operand.vmem [shape: f32[2,16,256], index: 7, kind: output, shape index: {0}]
  %s8 = inlined_call_operand.vmem [shape: f32[2,16,1], index: 8, kind: output, shape index: {1}]
  %s9 = inlined_call_operand.vmem [shape: f32[2,32,1], index: 9, kind: output, shape index: {2}]
  %10 = xla_tuple %s7, %s8, %s9
  %s11 = sld [smem:[#allocation0]]
  $region77: #{feature_extractor_forward.1} parent=0
    _
  %s13 = ssub.s32 1, %s11
  %s14 = scalar_select 0, %s13, %s11
  loop: start=0, step=1, limit=4
  $region2: #{feature_extractor_forward.1} parent=0 // loop_pre_header
    _
  $region3: #{feature_extractor_forward.1} parent=0 // loop_header
    %s16 = sphi 0, %s20
    %p17 = scmp.ge.s32.totalorder %s16, 4
    %s26 = sphi 0, %s28
    %s29 = sphi 0, %s26
    %s30 = sphi 0, %s29
    %s46 = sphi 0, %s30
    %s50 = sphi 0, %s50
    %s52 = sphi 0, %s50
    %s53 = sphi 0, %s52
    %s67 = sphi 0, %s53
    %s71 = sphi 0, %s71
    %s73 = sphi 0, %s71
    %s74 = sphi 0, %s73
    %s88 = sphi 0, %s74
    %s92 = sphi 0, %s92
    %s94 = sphi 0, %s92
    %s95 = sphi 0, %s94
    %s109 = sphi 0, %s95
    %s113 = sphi 0, %s113
    %s115 = sphi 0, %s113
    %s116 = sphi 0, %s115
    %s130 = sphi 0, %s116
    %s134 = sphi 0, %s134
    %s136 = sphi 0, %s134
    %s137 = sphi 0, %s136
    %s151 = sphi 0, %s137
    %s155 = sphi 0, %s155
    %s157 = sphi 0, %s155
    %s158 = sphi 0, %s157
    %s172 = sphi 0, %s158
    %s178 = sphi 0, %s180
    %s181 = sphi 0, %s178
    %s182 = sphi 0, %s181
    %s198 = sphi 0, %s182
    %s204 = sphi 0, %s206
    %s207 = sphi 0, %s204
    %s208 = sphi 0, %s207
    %s224 = sphi 0, %s208
    %s230 = sphi 0, %s232
    %s233 = sphi 0, %s230
    %s234 = sphi 0, %s233
    %s250 = sphi 0, %s234
  $region4: #{feature_extractor_forward.1} parent=0 // loop_header_branch
    %19 = sbr.rel (%p17) target = $region8
  $region5: #{feature_extractor_forward.1} parent=0 // loop_body
    %s21 = ssub.s32 %s16, 1
    %s22 = ssub.s32 %s16, 2
    %s23 = sadd.s32 %s16, 1
    %s24 = ssub.s32 %s16, %s23
    %p25 = scmp.eq.s32.totalorder %s24, 0
    %s27 = sadd.s32 %s26, 1
    %s28 = scalar_select %p25, %s26, %s27
    %p31 = pneg %p25
    %p32 = scmp.eq.s32.totalorder %s16, 1
    %p33 = por %p31, %p32
    %p34 = scmp.ne.s32.totalorder %s26, %s29
    %p35 = scmp.eq.s32.totalorder %s16, 0
    %p36 = por %p34, %p35
    %p37 = scmp.ne.s32.totalorder %s26, %s29
    %p38 = scmp.eq.s32.totalorder %s21, 1
    %p39 = por %p37, %p38
    %p40 = scmp.ne.s32.totalorder %s29, %s30
    %p41 = scmp.eq.s32.totalorder %s21, 0
    %p42 = por %p40, %p41
    %p43 = scmp.ne.s32.totalorder %s29, %s30
    %p44 = scmp.eq.s32.totalorder %s22, 1
    %p45 = por %p43, %p44
    %p47 = scmp.ne.s32.totalorder %s30, %s46
    %p48 = scmp.eq.s32.totalorder %s22, 0
    %p49 = por %p47, %p48
    %s51 = sadd.s32 %s50, 1
    %p54 = scmp.eq.s32.totalorder %s16, 1
    %p55 = scmp.ne.s32.totalorder %s50, %s52
    %p56 = scmp.eq.s32.totalorder %s16, 0
    %p57 = por %p55, %p56
    %p58 = scmp.ne.s32.totalorder %s50, %s52
    %p59 = scmp.eq.s32.totalorder %s21, 1
    %p60 = por %p58, %p59
    %p61 = scmp.ne.s32.totalorder %s52, %s53
    %p62 = scmp.eq.s32.totalorder %s21, 0
    %p63 = por %p61, %p62
    %p64 = scmp.ne.s32.totalorder %s52, %s53
    %p65 = scmp.eq.s32.totalorder %s22, 1
    %p66 = por %p64, %p65
    %p68 = scmp.ne.s32.totalorder %s53, %s67
    %p69 = scmp.eq.s32.totalorder %s22, 0
    %p70 = por %p68, %p69
    %s72 = sadd.s32 %s71, 1
    %p75 = scmp.eq.s32.totalorder %s16, 1
    %p76 = scmp.ne.s32.totalorder %s71, %s73
    %p77 = scmp.eq.s32.totalorder %s16, 0
    %p78 = por %p76, %p77
    %p79 = scmp.ne.s32.totalorder %s71, %s73
    %p80 = scmp.eq.s32.totalorder %s21, 1
    %p81 = por %p79, %p80
    %p82 = scmp.ne.s32.totalorder %s73, %s74
    %p83 = scmp.eq.s32.totalorder %s21, 0
    %p84 = por %p82, %p83
    %p85 = scmp.ne.s32.totalorder %s73, %s74
    %p86 = scmp.eq.s32.totalorder %s22, 1
    %p87 = por %p85, %p86
    %p89 = scmp.ne.s32.totalorder %s74, %s88
    %p90 = scmp.eq.s32.totalorder %s22, 0
    %p91 = por %p89, %p90
    %s93 = sadd.s32 %s92, 1
    %p96 = scmp.eq.s32.totalorder %s16, 1
    %p97 = scmp.ne.s32.totalorder %s92, %s94
    %p98 = scmp.eq.s32.totalorder %s16, 0
    %p99 = por %p97, %p98
    %p100 = scmp.ne.s32.totalorder %s92, %s94
    %p101 = scmp.eq.s32.totalorder %s21, 1
    %p102 = por %p100, %p101
    %p103 = scmp.ne.s32.totalorder %s94, %s95
    %p104 = scmp.eq.s32.totalorder %s21, 0
    %p105 = por %p103, %p104
    %p106 = scmp.ne.s32.totalorder %s94, %s95
    %p107 = scmp.eq.s32.totalorder %s22, 1
    %p108 = por %p106, %p107
    %p110 = scmp.ne.s32.totalorder %s95, %s109
    %p111 = scmp.eq.s32.totalorder %s22, 0
    %p112 = por %p110, %p111
    %s114 = sadd.s32 %s113, 1
    %p117 = scmp.eq.s32.totalorder %s16, 1
    %p118 = scmp.ne.s32.totalorder %s113, %s115
    %p119 = scmp.eq.s32.totalorder %s16, 0
    %p120 = por %p118, %p119
    %p121 = scmp.ne.s32.totalorder %s113, %s115
    %p122 = scmp.eq.s32.totalorder %s21, 1
    %p123 = por %p121, %p122
    %p124 = scmp.ne.s32.totalorder %s115, %s116
    %p125 = scmp.eq.s32.totalorder %s21, 0
    %p126 = por %p124, %p125
    %p127 = scmp.ne.s32.totalorder %s115, %s116
    %p128 = scmp.eq.s32.totalorder %s22, 1
    %p129 = por %p127, %p128
    %p131 = scmp.ne.s32.totalorder %s116, %s130
    %p132 = scmp.eq.s32.totalorder %s22, 0
    %p133 = por %p131, %p132
    %s135 = sadd.s32 %s134, 1
    %p138 = scmp.eq.s32.totalorder %s16, 1
    %p139 = scmp.ne.s32.totalorder %s134, %s136
    %p140 = scmp.eq.s32.totalorder %s16, 0
    %p141 = por %p139, %p140
    %p142 = scmp.ne.s32.totalorder %s134, %s136
    %p143 = scmp.eq.s32.totalorder %s21, 1
    %p144 = por %p142, %p143
    %p145 = scmp.ne.s32.totalorder %s136, %s137
    %p146 = scmp.eq.s32.totalorder %s21, 0
    %p147 = por %p145, %p146
    %p148 = scmp.ne.s32.totalorder %s136, %s137
    %p149 = scmp.eq.s32.totalorder %s22, 1
    %p150 = por %p148, %p149
    %p152 = scmp.ne.s32.totalorder %s137, %s151
    %p153 = scmp.eq.s32.totalorder %s22, 0
    %p154 = por %p152, %p153
    %s156 = sadd.s32 %s155, 1
    %p159 = scmp.eq.s32.totalorder %s16, 1
    %p160 = scmp.ne.s32.totalorder %s155, %s157
    %p161 = scmp.eq.s32.totalorder %s16, 0
    %p162 = por %p160, %p161
    %p163 = scmp.ne.s32.totalorder %s155, %s157
    %p164 = scmp.eq.s32.totalorder %s21, 1
    %p165 = por %p163, %p164
    %p166 = scmp.ne.s32.totalorder %s157, %s158
    %p167 = scmp.eq.s32.totalorder %s21, 0
    %p168 = por %p166, %p167
    %p169 = scmp.ne.s32.totalorder %s157, %s158
    %p170 = scmp.eq.s32.totalorder %s22, 1
    %p171 = por %p169, %p170
    %p173 = scmp.ne.s32.totalorder %s158, %s172
    %p174 = scmp.eq.s32.totalorder %s22, 0
    %p175 = por %p173, %p174
    %s176 = ssub.s32 %s16, %s23
    %p177 = scmp.eq.s32.totalorder %s176, 0
    %s179 = sadd.s32 %s178, 1
    %s180 = scalar_select %p177, %s178, %s179
    %p183 = pneg %p177
    %p184 = scmp.eq.s32.totalorder %s16, 1
    %p185 = por %p183, %p184
    %p186 = scmp.ne.s32.totalorder %s178, %s181
    %p187 = scmp.eq.s32.totalorder %s16, 0
    %p188 = por %p186, %p187
    %p189 = scmp.ne.s32.totalorder %s178, %s181
    %p190 = scmp.eq.s32.totalorder %s21, 1
    %p191 = por %p189, %p190
    %p192 = scmp.ne.s32.totalorder %s181, %s182
    %p193 = scmp.eq.s32.totalorder %s21, 0
    %p194 = por %p192, %p193
    %p195 = scmp.ne.s32.totalorder %s181, %s182
    %p196 = scmp.eq.s32.totalorder %s22, 1
    %p197 = por %p195, %p196
    %p199 = scmp.ne.s32.totalorder %s182, %s198
    %p200 = scmp.eq.s32.totalorder %s22, 0
    %p201 = por %p199, %p200
    %s202 = ssub.s32 %s16, %s23
    %p203 = scmp.eq.s32.totalorder %s202, 0
    %s205 = sadd.s32 %s204, 1
    %s206 = scalar_select %p203, %s204, %s205
    %p209 = pneg %p203
    %p210 = scmp.eq.s32.totalorder %s16, 1
    %p211 = por %p209, %p210
    %p212 = scmp.ne.s32.totalorder %s204, %s207
    %p213 = scmp.eq.s32.totalorder %s16, 0
    %p214 = por %p212, %p213
    %p215 = scmp.ne.s32.totalorder %s204, %s207
    %p216 = scmp.eq.s32.totalorder %s21, 1
    %p217 = por %p215, %p216
    %p218 = scmp.ne.s32.totalorder %s207, %s208
    %p219 = scmp.eq.s32.totalorder %s21, 0
    %p220 = por %p218, %p219
    %p221 = scmp.ne.s32.totalorder %s207, %s208
    %p222 = scmp.eq.s32.totalorder %s22, 1
    %p223 = por %p221, %p222
    %p225 = scmp.ne.s32.totalorder %s208, %s224
    %p226 = scmp.eq.s32.totalorder %s22, 0
    %p227 = por %p225, %p226
    %s228 = ssub.s32 %s16, %s23
    %p229 = scmp.eq.s32.totalorder %s228, 0
    %s231 = sadd.s32 %s230, 1
    %s232 = scalar_select %p229, %s230, %s231
    %p235 = pneg %p229
    %p236 = scmp.eq.s32.totalorder %s16, 1
    %p237 = por %p235, %p236
    %p238 = scmp.ne.s32.totalorder %s230, %s233
    %p239 = scmp.eq.s32.totalorder %s16, 0
    %p240 = por %p238, %p239
    %p241 = scmp.ne.s32.totalorder %s230, %s233
    %p242 = scmp.eq.s32.totalorder %s21, 1
    %p243 = por %p241, %p242
    %p244 = scmp.ne.s32.totalorder %s233, %s234
    %p245 = scmp.eq.s32.totalorder %s21, 0
    %p246 = por %p244, %p245
    %p247 = scmp.ne.s32.totalorder %s233, %s234
    %p248 = scmp.eq.s32.totalorder %s22, 1
    %p249 = por %p247, %p248
    %p251 = scmp.ne.s32.totalorder %s234, %s250
    %p252 = scmp.eq.s32.totalorder %s22, 0
    %p253 = por %p251, %p252
    %p254 = scmp.le.s32.totalorder 1, %s16
    %p255 = scmp.lt.s32.totalorder %s16, 3
    %p256 = pnand %p254, %p255
    %p257 = pneg %p256
    // Predicated region
    $region9: #{feature_extractor_forward.1} parent=5 // pred_check
      _
    $region10: #{feature_extractor_forward.1} parent=5 // pred_check_branch
      %259 = sbr.rel (%p256) target = $region12
    $region11: #{feature_extractor_forward.1} parent=5 // pred_region
      %s260 = ssub.s32 %s16, 1
      // Predicated region
      $region13: #{feature_extractor_forward.1} parent=11 // pred_check
        %p261 = pneg %p63
      $region14: #{feature_extractor_forward.1} parent=11 // pred_check_branch
        %263 = sbr.rel (%p261) target = $region16
      $region15: #{feature_extractor_forward.1} parent=11 // pred_region
        _
      $region16: #{feature_extractor_forward.1} parent=11 // pred_fallthru
        _
      // Predicated region
      $region17: #{feature_extractor_forward.1} parent=11 // pred_check
        %p264 = pneg %p84
      $region18: #{feature_extractor_forward.1} parent=11 // pred_check_branch
        %266 = sbr.rel (%p264) target = $region20
      $region19: #{feature_extractor_forward.1} parent=11 // pred_region
        _
      $region20: #{feature_extractor_forward.1} parent=11 // pred_fallthru
        _
      // Predicated region
      $region21: #{feature_extractor_forward.1} parent=11 // pred_check
        %p267 = pneg %p105
      $region22: #{feature_extractor_forward.1} parent=11 // pred_check_branch
        %269 = sbr.rel (%p267) target = $region24
      $region23: #{feature_extractor_forward.1} parent=11 // pred_region
        _
      $region24: #{feature_extractor_forward.1} parent=11 // pred_fallthru
        _
      // Predicated region
      $region25: #{feature_extractor_forward.1} parent=11 // pred_check
        %p270 = pneg %p126
      $region26: #{feature_extractor_forward.1} parent=11 // pred_check_branch
        %272 = sbr.rel (%p270) target = $region28
      $region27: #{feature_extractor_forward.1} parent=11 // pred_region
        _
      $region28: #{feature_extractor_forward.1} parent=11 // pred_fallthru
        _
      // Predicated region
      $region29: #{feature_extractor_forward.1} parent=11 // pred_check
        %p273 = pneg %p147
      $region30: #{feature_extractor_forward.1} parent=11 // pred_check_branch
        %275 = sbr.rel (%p273) target = $region32
      $region31: #{feature_extractor_forward.1} parent=11 // pred_region
        _
      $region32: #{feature_extractor_forward.1} parent=11 // pred_fallthru
        _
      // Predicated region
      $region33: #{feature_extractor_forward.1} parent=11 // pred_check
        %p276 = pneg %p168
      $region34: #{feature_extractor_forward.1} parent=11 // pred_check_branch
        %278 = sbr.rel (%p276) target = $region36
      $region35: #{feature_extractor_forward.1} parent=11 // pred_region
        _
      $region36: #{feature_extractor_forward.1} parent=11 // pred_fallthru
        _
    $region12: #{feature_extractor_forward.1} parent=5 // pred_fallthru
      _
    %p279 = scmp.lt.s32.totalorder %s16, 2
    // Predicated region
    $region37: #{feature_extractor_forward.1} parent=5 // pred_check
      %p280 = pneg %p279
    $region38: #{feature_extractor_forward.1} parent=5 // pred_check_branch
      %282 = sbr.rel (%p280) target = $region40
    $region39: #{feature_extractor_forward.1} parent=5 // pred_region
      // Predicated region
      $region41: #{feature_extractor_forward.1} parent=39 // pred_check
        %p283 = pneg %p36
      $region42: #{feature_extractor_forward.1} parent=39 // pred_check_branch
        %285 = sbr.rel (%p283) target = $region44
      $region43: #{feature_extractor_forward.1} parent=39 // pred_region
        %p286 = scmp.lt.s32.totalorder %s16, 1
        %s287 = scalar_select %p286, %s16, 1
        %s288 = smul.addr %s287, 2
        %s289 = smul.addr %s288, 4
        %s290 = scalar_lea.vmem %s0, %s289
      $region44: #{feature_extractor_forward.1} parent=39 // pred_fallthru
        _
    $region40: #{feature_extractor_forward.1} parent=5 // pred_fallthru
      _
    %p291 = scmp.le.s32.totalorder 1, %s16
    %p292 = scmp.lt.s32.totalorder %s16, 3
    %p293 = pnand %p291, %p292
    %p294 = pneg %p293
    // Predicated region
    $region45: #{feature_extractor_forward.1} parent=5 // pred_check
      _
    $region46: #{feature_extractor_forward.1} parent=5 // pred_check_branch
      %296 = sbr.rel (%p293) target = $region48
    $region47: #{feature_extractor_forward.1} parent=5 // pred_region
      %s297 = ssub.s32 %s16, 1
      %p298 = scmp.lt.s32.totalorder %s21, 1
      %s299 = scalar_select %p298, %s21, 1
      %s300 = smul.addr %s299, 2
      %s301 = smul.addr %s300, 4
      %s302 = scalar_lea.vmem %s0, %s301
      %p303 = pneg %p42
      %p304 = pneg %p39
      %p305 = pneg %p63
      %p306 = pneg %p60
      %p307 = pneg %p84
      %p308 = pneg %p81
      %p309 = pneg %p105
      %p310 = pneg %p102
      %p311 = pneg %p126
      %p312 = pneg %p123
      %p313 = pneg %p147
      %p314 = pneg %p144
      %p315 = pneg %p168
      %p316 = pneg %p165
      %p317 = pneg %p194
      %p318 = pneg %p191
      %p319 = scmp.lt.s32.totalorder %s21, 1
      %s320 = scalar_select %p319, %s21, 1
      %s321 = smul.addr %s320, 4
      %s322 = smul.addr %s321, 8
      %s323 = scalar_lea.vmem %s7, %s322
      %p324 = pneg %p220
      %p325 = pneg %p217
      %p326 = scmp.lt.s32.totalorder %s21, 1
      %s327 = scalar_select %p326, %s21, 1
      %s328 = smul.addr %s327, 2
      %s329 = smul.addr %s328, 8
      %s330 = scalar_lea.vmem %s8, %s329
      %p331 = pneg %p246
      %p332 = pneg %p243
      %p333 = scmp.lt.s32.totalorder %s21, 1
      %s334 = scalar_select %p333, %s21, 1
      %s335 = smul.addr %s334, 4
      %s336 = smul.addr %s335, 8
      %s337 = scalar_lea.vmem %s9, %s336
      %p338 = scmp.lt.s32.totalorder %s21, 1
      %s339 = scalar_select %p338, %s21, 1
      %s340 = smul.addr %s339, 2
      %s341 = smul.addr %s340, 4
      %s342 = scalar_lea.vmem %s0, %s341
      %p343 = scmp.lt.s32.totalorder %s21, 1
      %s344 = scalar_select %p343, %s21, 1
      %s345 = smul.addr %s344, 4
      %s346 = smul.addr %s345, 8
      %s347 = scalar_lea.vmem %s7, %s346
      %p348 = scmp.lt.s32.totalorder %s21, 1
      %s349 = scalar_select %p348, %s21, 1
      %s350 = smul.addr %s349, 2
      %s351 = smul.addr %s350, 8
      %s352 = scalar_lea.vmem %s8, %s351
      %p353 = scmp.lt.s32.totalorder %s21, 1
      %s354 = scalar_select %p353, %s21, 1
      %s355 = smul.addr %s354, 4
      %s356 = smul.addr %s355, 8
      %s357 = scalar_lea.vmem %s9, %s356
      %v358 = vld [vmem:[%s342] sm:$0xff]
      %v359 = vlaneseq
      %v360 = vand.u32 %v359, 127
      %v361 = vadd.s32 %v360, 128
      %vm362 = vcmp.lt.s32.totalorder %v360, 0
      %v363 = vsub.s32 0, %v360
      %v364 = vsel %vm362, %v363, %v360
      %v365 = vshrl.u32 %v364, 4
      %v366 = vand.u32 %v364, 15
      %v367 = vsub.s32 0, %v366
      %v368 = vsel %vm362, %v367, %v366
      %vm369 = vcmp.lt.s32.totalorder %v361, 0
      %v370 = vsub.s32 0, %v361
      %v371 = vsel %vm369, %v370, %v361
      %v372 = vshrl.u32 %v371, 4
      %v373 = vand.u32 %v371, 15
      %v374 = vsub.s32 0, %v373
      %v375 = vsel %vm369, %v374, %v373
      %vm376 = vcmp.ne.s32.totalorder %v368, 0
      %vm377 = vcmp.ne.s32.totalorder %v375, 0
      %vm378 = vcmp.lt.s32.totalorder %v368, 0
      %vm379 = vcmp.lt.s32.totalorder %v375, 0
      %vm380 = vmand %vm378, %vm376
      %vm381 = vmand %vm379, %vm377
      %v382 = vadd.s32 %v368, 16
      %v383 = vadd.s32 %v375, 16
      %v384 = vsel %vm380, %v382, %v368
      %v385 = vsel %vm381, %v383, %v375
      %vm386 = vcmp.gt.s32.totalorder %v384, 0
      %vm387 = vcmp.gt.s32.totalorder %v385, 0
      %vm388 = vcmp.lt.s32.totalorder %v384, 15
      %vm389 = vcmp.lt.s32.totalorder %v385, 15
      %v391 = vcombine.high %v358, %v358
      %393 = vrot.lane.b32.xlu0 0.0, 17
      %v394 = vpop.permute.xlu0 %393
      %395 = vrot.lane.b32.xlu0 %v358, 17
      %v396 = vpop.permute.xlu0 %395
      %397 = vrot.lane.b32.xlu0 %v391, 17
      %v398 = vpop.permute.xlu0 %397
      %vm399 = vcmask 138240
      %v400 = vsel %vm399, %v394, %v396
      %v401 = vsel %vm399, %v396, %v398
      %v404 = vsel %vm386, %v400, 0.0
      %v405 = vsel %vm387, %v401, 0.0
      %v406 = vld [vmem:[%s1] sm:$0xff]
      %s407 = scalar_lea.vmem %s1, 8
      %v408 = vld [vmem:[%s407] sm:$0xff]
      %409 = vrot.lane.b32.xlu0 0.0, 16
      %v410 = vpop.permute.xlu0 %409
      %411 = vrot.lane.b32.xlu0 %v358, 16
      %v412 = vpop.permute.xlu0 %411
      %413 = vrot.lane.b32.xlu0 %v391, 16
      %v414 = vpop.permute.xlu0 %413
      %vm415 = vcmask 130048
      %v416 = vsel %vm415, %v410, %v412
      %v417 = vsel %vm415, %v412, %v414
      %vm418 = vcmask 31744
      %v420 = vsel %vm418, %v408, 0
      %vm422 = vcmask 1043456
      %v423 = vsel %vm422, %v416, 0
      %v425 = vsel %vm422, %v417, 0
      %427 = vmatprep.subr.mxu0 %v425
      %428 = vmatpush1.msra.mxu0 %v423
      %429 = vmatprep.subr.mxu0 0.0
      %430 = vmatpush1.msra.mxu0 0.0
      %431 = vmatprep.subr.mxu0 0.0
      %432 = vmatpush1.msra.mxu0 0.0
      %433 = vmatprep.subr.mxu0 0.0
      %434 = vmatpush1.msra.mxu0 0.0
      %435 = vmatprep.subr.mxu0 0.0
      %436 = vmatpush1.msra.mxu0 0.0
      %437 = vmatprep.subr.mxu0 0.0
      %438 = vmatpush1.msra.mxu0 0.0
      %439 = vmatprep.subr.mxu0 0.0
      %440 = vmatpush1.msra.mxu0 0.0
      %441 = vmatprep.subr.mxu0 0.0
      %442 = vmatpush1.msra.mxu0 0.0
      %443 = vmatprep.subr.mxu0 0.0
      %444 = vmatpush1.msra.mxu0 0.0
      %445 = vmatprep.subr.mxu0 0.0
      %446 = vmatpush1.msra.mxu0 0.0
      %447 = vmatprep.subr.mxu0 0.0
      %448 = vmatpush1.msra.mxu0 0.0
      %449 = vmatprep.subr.mxu0 0.0
      %450 = vmatpush1.msra.mxu0 0.0
      %451 = vmatprep.subr.mxu0 0.0
      %452 = vmatpush1.msra.mxu0 0.0
      %453 = vmatprep.subr.mxu0 0.0
      %454 = vmatpush1.msra.mxu0 0.0
      %455 = vmatprep.subr.mxu0 0.0
      %456 = vmatpush1.msra.mxu0 0.0
      %457 = vmatprep.subr.mxu0 0.0
      %458 = vmatpush1.msra.mxu0 0.0
      %459 = vmatprep.subr.mxu0 0.0
      %460 = vmatpush1.msra.mxu0 0.0
      %461 = vmatprep.subr.mxu0 0.0
      %462 = vmatpush1.msra.mxu0 0.0
      %463 = vmatprep.subr.mxu0 0.0
      %464 = vmatpush1.msra.mxu0 0.0
      %465 = vmatprep.subr.mxu0 0.0
      %466 = vmatpush1.msra.mxu0 0.0
      %467 = vmatprep.subr.mxu0 0.0
      %468 = vmatpush1.msra.mxu0 0.0
      %469 = vmatprep.subr.mxu0 0.0
      %470 = vmatpush1.msra.mxu0 0.0
      %471 = vmatprep.subr.mxu0 0.0
      %472 = vmatpush1.msra.mxu0 0.0
      %473 = vmatprep.subr.mxu0 0.0
      %474 = vmatpush1.msra.mxu0 0.0
      %475 = vmatprep.subr.mxu0 0.0
      %476 = vmatpush1.msra.mxu0 0.0
      %477 = vmatprep.subr.mxu0 0.0
      %478 = vmatpush1.msra.mxu0 0.0
      %479 = vmatprep.subr.mxu0 0.0
      %480 = vmatpush1.msra.mxu0 0.0
      %481 = vmatprep.subr.mxu0 0.0
      %482 = vmatpush1.msra.mxu0 0.0
      %483 = vmatprep.subr.mxu0 0.0
      %484 = vmatpush1.msra.mxu0 0.0
      %485 = vmatprep.subr.mxu0 0.0
      %486 = vmatpush1.msra.mxu0 0.0
      %487 = vmatprep.subr.mxu0 0.0
      %488 = vmatpush1.msra.mxu0 0.0
      %489 = vmatprep.subr.mxu0 0.0
      %490 = vmatpush1.msra.mxu0 0.0
      %491 = vmatprep.mubr.f32.mxu0 0.0
      %492 = vmatmul.mubr.f32.gmra.mrb[0].mxu0 %v420
      %v493 = vpop.f32.mrb[0].mxu0
      %v494 = vadd.f32 0.0, %v493
      %v495 = vpop.f32.mrb[0].mxu0
      %v496 = vadd.f32 0.0, %v495
      %497 = vdwg.mxu0
      %v499 = vsel %vm418, %v406, 0
      %v502 = vsel %vm422, %v404, 0
      %v505 = vsel %vm422, %v405, 0
      %507 = vmatprep.subr.mxu0 %v505
      %508 = vmatpush1.msra.mxu0 %v502
      %509 = vmatprep.subr.mxu0 0.0
      %510 = vmatpush1.msra.mxu0 0.0
      %511 = vmatprep.subr.mxu0 0.0
      %512 = vmatpush1.msra.mxu0 0.0
      %513 = vmatprep.subr.mxu0 0.0
      %514 = vmatpush1.msra.mxu0 0.0
      %515 = vmatprep.subr.mxu0 0.0
      %516 = vmatpush1.msra.mxu0 0.0
      %517 = vmatprep.subr.mxu0 0.0
      %518 = vmatpush1.msra.mxu0 0.0
      %519 = vmatprep.subr.mxu0 0.0
      %520 = vmatpush1.msra.mxu0 0.0
      %521 = vmatprep.subr.mxu0 0.0
      %522 = vmatpush1.msra.mxu0 0.0
      %523 = vmatprep.subr.mxu0 0.0
      %524 = vmatpush1.msra.mxu0 0.0
      %525 = vmatprep.subr.mxu0 0.0
      %526 = vmatpush1.msra.mxu0 0.0
      %527 = vmatprep.subr.mxu0 0.0
      %528 = vmatpush1.msra.mxu0 0.0
      %529 = vmatprep.subr.mxu0 0.0
      %530 = vmatpush1.msra.mxu0 0.0
      %531 = vmatprep.subr.mxu0 0.0
      %532 = vmatpush1.msra.mxu0 0.0
      %533 = vmatprep.subr.mxu0 0.0
      %534 = vmatpush1.msra.mxu0 0.0
      %535 = vmatprep.subr.mxu0 0.0
      %536 = vmatpush1.msra.mxu0 0.0
      %537 = vmatprep.subr.mxu0 0.0
      %538 = vmatpush1.msra.mxu0 0.0
      %539 = vmatprep.subr.mxu0 0.0
      %540 = vmatpush1.msra.mxu0 0.0
      %541 = vmatprep.subr.mxu0 0.0
      %542 = vmatpush1.msra.mxu0 0.0
      %543 = vmatprep.subr.mxu0 0.0
      %544 = vmatpush1.msra.mxu0 0.0
      %545 = vmatprep.subr.mxu0 0.0
      %546 = vmatpush1.msra.mxu0 0.0
      %547 = vmatprep.subr.mxu0 0.0
      %548 = vmatpush1.msra.mxu0 0.0
      %549 = vmatprep.subr.mxu0 0.0
      %550 = vmatpush1.msra.mxu0 0.0
      %551 = vmatprep.subr.mxu0 0.0
      %552 = vmatpush1.msra.mxu0 0.0
      %553 = vmatprep.subr.mxu0 0.0
      %554 = vmatpush1.msra.mxu0 0.0
      %555 = vmatprep.subr.mxu0 0.0
      %556 = vmatpush1.msra.mxu0 0.0
      %557 = vmatprep.subr.mxu0 0.0
      %558 = vmatpush1.msra.mxu0 0.0
      %559 = vmatprep.subr.mxu0 0.0
      %560 = vmatpush1.msra.mxu0 0.0
      %561 = vmatprep.subr.mxu0 0.0
      %562 = vmatpush1.msra.mxu0 0.0
      %563 = vmatprep.subr.mxu0 0.0
      %564 = vmatpush1.msra.mxu0 0.0
      %565 = vmatprep.subr.mxu0 0.0
      %566 = vmatpush1.msra.mxu0 0.0
      %567 = vmatprep.subr.mxu0 0.0
      %568 = vmatpush1.msra.mxu0 0.0
      %569 = vmatprep.subr.mxu0 0.0
      %570 = vmatpush1.msra.mxu0 0.0
      %571 = vmatprep.mubr.f32.mxu0 0.0
      %572 = vmatmul.mubr.f32.gmra.mrb[0].mxu0 %v499
      %v573 = vpop.f32.mrb[0].mxu0
      %v574 = vadd.f32 %v494, %v573
      %v575 = vpop.f32.mrb[0].mxu0
      %v576 = vadd.f32 %v496, %v575
      %577 = vdwg.mxu0
      %578 = vrot.lane.b32.xlu0 0.0, 15
      %v579 = vpop.permute.xlu0 %578
      %580 = vrot.lane.b32.xlu0 %v358, 15
      %v581 = vpop.permute.xlu0 %580
      %582 = vrot.lane.b32.xlu0 %v391, 15
      %v583 = vpop.permute.xlu0 %582
      %vm584 = vcmask 121856
      %v585 = vsel %vm584, %v579, %v581
      %v586 = vsel %vm584, %v581, %v583
      %v589 = vsel %vm388, %v585, 0.0
      %v590 = vsel %vm389, %v586, 0.0
      %s591 = scalar_lea.vmem %s1, 16
      %v592 = vld [vmem:[%s591] sm:$0xff]
      %v594 = vsel %vm418, %v592, 0
      %v597 = vsel %vm422, %v589, 0
      %v600 = vsel %vm422, %v590, 0
      %602 = vmatprep.subr.mxu0 %v600
      %603 = vmatpush1.msra.mxu0 %v597
      %604 = vmatprep.subr.mxu0 0.0
      %605 = vmatpush1.msra.mxu0 0.0
      %606 = vmatprep.subr.mxu0 0.0
      %607 = vmatpush1.msra.mxu0 0.0
      %608 = vmatprep.subr.mxu0 0.0
      %609 = vmatpush1.msra.mxu0 0.0
      %610 = vmatprep.subr.mxu0 0.0
      %611 = vmatpush1.msra.mxu0 0.0
      %612 = vmatprep.subr.mxu0 0.0
      %613 = vmatpush1.msra.mxu0 0.0
      %614 = vmatprep.subr.mxu0 0.0
      %615 = vmatpush1.msra.mxu0 0.0
      %616 = vmatprep.subr.mxu0 0.0
      %617 = vmatpush1.msra.mxu0 0.0
      %618 = vmatprep.subr.mxu0 0.0
      %619 = vmatpush1.msra.mxu0 0.0
      %620 = vmatprep.subr.mxu0 0.0
      %621 = vmatpush1.msra.mxu0 0.0
      %622 = vmatprep.subr.mxu0 0.0
      %623 = vmatpush1.msra.mxu0 0.0
      %624 = vmatprep.subr.mxu0 0.0
      %625 = vmatpush1.msra.mxu0 0.0
      %626 = vmatprep.subr.mxu0 0.0
      %627 = vmatpush1.msra.mxu0 0.0
      %628 = vmatprep.subr.mxu0 0.0
      %629 = vmatpush1.msra.mxu0 0.0
      %630 = vmatprep.subr.mxu0 0.0
      %631 = vmatpush1.msra.mxu0 0.0
      %632 = vmatprep.subr.mxu0 0.0
      %633 = vmatpush1.msra.mxu0 0.0
      %634 = vmatprep.subr.mxu0 0.0
      %635 = vmatpush1.msra.mxu0 0.0
      %636 = vmatprep.subr.mxu0 0.0
      %637 = vmatpush1.msra.mxu0 0.0
      %638 = vmatprep.subr.mxu0 0.0
      %639 = vmatpush1.msra.mxu0 0.0
      %640 = vmatprep.subr.mxu0 0.0
      %641 = vmatpush1.msra.mxu0 0.0
      %642 = vmatprep.subr.mxu0 0.0
      %643 = vmatpush1.msra.mxu0 0.0
      %644 = vmatprep.subr.mxu0 0.0
      %645 = vmatpush1.msra.mxu0 0.0
      %646 = vmatprep.subr.mxu0 0.0
      %647 = vmatpush1.msra.mxu0 0.0
      %648 = vmatprep.subr.mxu0 0.0
      %649 = vmatpush1.msra.mxu0 0.0
      %650 = vmatprep.subr.mxu0 0.0
      %651 = vmatpush1.msra.mxu0 0.0
      %652 = vmatprep.subr.mxu0 0.0
      %653 = vmatpush1.msra.mxu0 0.0
      %654 = vmatprep.subr.mxu0 0.0
      %655 = vmatpush1.msra.mxu0 0.0
      %656 = vmatprep.subr.mxu0 0.0
      %657 = vmatpush1.msra.mxu0 0.0
      %658 = vmatprep.subr.mxu0 0.0
      %659 = vmatpush1.msra.mxu0 0.0
      %660 = vmatprep.subr.mxu0 0.0
      %661 = vmatpush1.msra.mxu0 0.0
      %662 = vmatprep.subr.mxu0 0.0
      %663 = vmatpush1.msra.mxu0 0.0
      %664 = vmatprep.subr.mxu0 0.0
      %665 = vmatpush1.msra.mxu0 0.0
      %666 = vmatprep.mubr.f32.mxu0 0.0
      %667 = vmatmul.mubr.f32.gmra.mrb[0].mxu0 %v594
      %v668 = vpop.f32.mrb[0].mxu0
      %v669 = vadd.f32 0.0, %v668
      %v670 = vpop.f32.mrb[0].mxu0
      %v671 = vadd.f32 0.0, %v670
      %672 = vdwg.mxu0
      %v673 = vadd.f32 %v574, %v669
      %v674 = vadd.f32 %v576, %v671
      %675 = vrot.lane.b32.xlu0 0.0, 1
      %v676 = vpop.permute.xlu0 %675
      %677 = vrot.lane.b32.xlu0 %v358, 1
      %v678 = vpop.permute.xlu0 %677
      %679 = vrot.lane.b32.xlu0 %v391, 1
      %v680 = vpop.permute.xlu0 %679
      %vm681 = vcmask 7168
      %v682 = vsel %vm681, %v676, %v678
      %v683 = vsel %vm681, %v678, %v680
      %v686 = vsel %vm386, %v682, 0.0
      %v687 = vsel %vm387, %v683, 0.0
      %s688 = scalar_lea.vmem %s1, 24
      %v689 = vld [vmem:[%s688] sm:$0xff]
      %v691 = vsel %vm418, %v689, 0
      %v694 = vsel %vm422, %v686, 0
      %v697 = vsel %vm422, %v687, 0
      %699 = vmatprep.subr.mxu0 %v697
      %700 = vmatpush1.msra.mxu0 %v694
      %701 = vmatprep.subr.mxu0 0.0
      %702 = vmatpush1.msra.mxu0 0.0
      %703 = vmatprep.subr.mxu0 0.0
      %704 = vmatpush1.msra.mxu0 0.0
      %705 = vmatprep.subr.mxu0 0.0
      %706 = vmatpush1.msra.mxu0 0.0
      %707 = vmatprep.subr.mxu0 0.0
      %708 = vmatpush1.msra.mxu0 0.0
      %709 = vmatprep.subr.mxu0 0.0
      %710 = vmatpush1.msra.mxu0 0.0
      %711 = vmatprep.subr.mxu0 0.0
      %712 = vmatpush1.msra.mxu0 0.0
      %713 = vmatprep.subr.mxu0 0.0
      %714 = vmatpush1.msra.mxu0 0.0
      %715 = vmatprep.subr.mxu0 0.0
      %716 = vmatpush1.msra.mxu0 0.0
      %717 = vmatprep.subr.mxu0 0.0
      %718 = vmatpush1.msra.mxu0 0.0
      %719 = vmatprep.subr.mxu0 0.0
      %720 = vmatpush1.msra.mxu0 0.0
      %721 = vmatprep.subr.mxu0 0.0
      %722 = vmatpush1.msra.mxu0 0.0
      %723 = vmatprep.subr.mxu0 0.0
      %724 = vmatpush1.msra.mxu0 0.0
      %725 = vmatprep.subr.mxu0 0.0
      %726 = vmatpush1.msra.mxu0 0.0
      %727 = vmatprep.subr.mxu0 0.0
      %728 = vmatpush1.msra.mxu0 0.0
      %729 = vmatprep.subr.mxu0 0.0
      %730 = vmatpush1.msra.mxu0 0.0
      %731 = vmatprep.subr.mxu0 0.0
      %732 = vmatpush1.msra.mxu0 0.0
      %733 = vmatprep.subr.mxu0 0.0
      %734 = vmatpush1.msra.mxu0 0.0
      %735 = vmatprep.subr.mxu0 0.0
      %736 = vmatpush1.msra.mxu0 0.0
      %737 = vmatprep.subr.mxu0 0.0
      %738 = vmatpush1.msra.mxu0 0.0
      %739 = vmatprep.subr.mxu0 0.0
      %740 = vmatpush1.msra.mxu0 0.0
      %741 = vmatprep.subr.mxu0 0.0
      %742 = vmatpush1.msra.mxu0 0.0
      %743 = vmatprep.subr.mxu0 0.0
      %744 = vmatpush1.msra.mxu0 0.0
      %745 = vmatprep.subr.mxu0 0.0
      %746 = vmatpush1.msra.mxu0 0.0
      %747 = vmatprep.subr.mxu0 0.0
      %748 = vmatpush1.msra.mxu0 0.0
      %749 = vmatprep.subr.mxu0 0.0
      %750 = vmatpush1.msra.mxu0 0.0
      %751 = vmatprep.subr.mxu0 0.0
      %752 = vmatpush1.msra.mxu0 0.0
      %753 = vmatprep.subr.mxu0 0.0
      %754 = vmatpush1.msra.mxu0 0.0
      %755 = vmatprep.subr.mxu0 0.0
      %756 = vmatpush1.msra.mxu0 0.0
      %757 = vmatprep.subr.mxu0 0.0
      %758 = vmatpush1.msra.mxu0 0.0
      %759 = vmatprep.subr.mxu0 0.0
      %760 = vmatpush1.msra.mxu0 0.0
      %761 = vmatprep.subr.mxu0 0.0
      %762 = vmatpush1.msra.mxu0 0.0
      %763 = vmatprep.mubr.f32.mxu0 0.0
      %764 = vmatmul.mubr.f32.gmra.mrb[0].mxu0 %v691
      %v765 = vpop.f32.mrb[0].mxu0
      %v766 = vadd.f32 0.0, %v765
      %v767 = vpop.f32.mrb[0].mxu0
      %v768 = vadd.f32 0.0, %v767
      %769 = vdwg.mxu0
      %v770 = vadd.f32 %v673, %v766
      %v771 = vadd.f32 %v674, %v768
      %s772 = scalar_lea.vmem %s1, 32
      %v773 = vld [vmem:[%s772] sm:$0xff]
      %v775 = vsel %vm418, %v773, 0
      %v777 = vsel %vm422, %v358, 0
      %v779 = vsel %vm422, %v391, 0
      %781 = vmatprep.subr.mxu0 %v779
      %782 = vmatpush1.msra.mxu0 %v777
      %783 = vmatprep.subr.mxu0 0.0
      %784 = vmatpush1.msra.mxu0 0.0
      %785 = vmatprep.subr.mxu0 0.0
      %786 = vmatpush1.msra.mxu0 0.0
      %787 = vmatprep.subr.mxu0 0.0
      %788 = vmatpush1.msra.mxu0 0.0
      %789 = vmatprep.subr.mxu0 0.0
      %790 = vmatpush1.msra.mxu0 0.0
      %791 = vmatprep.subr.mxu0 0.0
      %792 = vmatpush1.msra.mxu0 0.0
      %793 = vmatprep.subr.mxu0 0.0
      %794 = vmatpush1.msra.mxu0 0.0
      %795 = vmatprep.subr.mxu0 0.0
      %796 = vmatpush1.msra.mxu0 0.0
      %797 = vmatprep.subr.mxu0 0.0
      %798 = vmatpush1.msra.mxu0 0.0
      %799 = vmatprep.subr.mxu0 0.0
      %800 = vmatpush1.msra.mxu0 0.0
      %801 = vmatprep.subr.mxu0 0.0
      %802 = vmatpush1.msra.mxu0 0.0
      %803 = vmatprep.subr.mxu0 0.0
      %804 = vmatpush1.msra.mxu0 0.0
      %805 = vmatprep.subr.mxu0 0.0
      %806 = vmatpush1.msra.mxu0 0.0
      %807 = vmatprep.subr.mxu0 0.0
      %808 = vmatpush1.msra.mxu0 0.0
      %809 = vmatprep.subr.mxu0 0.0
      %810 = vmatpush1.msra.mxu0 0.0
      %811 = vmatprep.subr.mxu0 0.0
      %812 = vmatpush1.msra.mxu0 0.0
      %813 = vmatprep.subr.mxu0 0.0
      %814 = vmatpush1.msra.mxu0 0.0
      %815 = vmatprep.subr.mxu0 0.0
      %816 = vmatpush1.msra.mxu0 0.0
      %817 = vmatprep.subr.mxu0 0.0
      %818 = vmatpush1.msra.mxu0 0.0
      %819 = vmatprep.subr.mxu0 0.0
      %820 = vmatpush1.msra.mxu0 0.0
      %821 = vmatprep.subr.mxu0 0.0
      %822 = vmatpush1.msra.mxu0 0.0
      %823 = vmatprep.subr.mxu0 0.0
      %824 = vmatpush1.msra.mxu0 0.0
      %825 = vmatprep.subr.mxu0 0.0
      %826 = vmatpush1.msra.mxu0 0.0
      %827 = vmatprep.subr.mxu0 0.0
      %828 = vmatpush1.msra.mxu0 0.0
      %829 = vmatprep.subr.mxu0 0.0
      %830 = vmatpush1.msra.mxu0 0.0
      %831 = vmatprep.subr.mxu0 0.0
      %832 = vmatpush1.msra.mxu0 0.0
      %833 = vmatprep.subr.mxu0 0.0
      %834 = vmatpush1.msra.mxu0 0.0
      %835 = vmatprep.subr.mxu0 0.0
      %836 = vmatpush1.msra.mxu0 0.0
      %837 = vmatprep.subr.mxu0 0.0
      %838 = vmatpush1.msra.mxu0 0.0
      %839 = vmatprep.subr.mxu0 0.0
      %840 = vmatpush1.msra.mxu0 0.0
      %841 = vmatprep.subr.mxu0 0.0
      %842 = vmatpush1.msra.mxu0 0.0
      %843 = vmatprep.subr.mxu0 0.0
      %844 = vmatpush1.msra.mxu0 0.0
      %845 = vmatprep.mubr.f32.mxu0 0.0
      %846 = vmatmul.mubr.f32.gmra.mrb[0].mxu0 %v775
      %v847 = vpop.f32.mrb[0].mxu0
      %v848 = vadd.f32 0.0, %v847
      %v849 = vpop.f32.mrb[0].mxu0
      %v850 = vadd.f32 0.0, %v849
      %851 = vdwg.mxu0
      %v852 = vadd.f32 %v770, %v848
      %v853 = vadd.f32 %v771, %v850
      %854 = vrot.lane.b32.xlu0 %v358, 127
      %v855 = vpop.permute.xlu0 %854
      %856 = vrot.lane.b32.xlu0 %v391, 127
      %v857 = vpop.permute.xlu0 %856
      %858 = vrot.lane.b32.xlu0 0.0, 127
      %v859 = vpop.permute.xlu0 %858
      %vm860 = vcmask 1039360
      %v861 = vsel %vm860, %v855, %v857
      %v862 = vsel %vm860, %v857, %v859
      %v865 = vsel %vm388, %v861, 0.0
      %v866 = vsel %vm389, %v862, 0.0
      %s867 = scalar_lea.vmem %s1, 40
      %v868 = vld [vmem:[%s867] sm:$0xff]
      %v870 = vsel %vm418, %v868, 0
      %v873 = vsel %vm422, %v865, 0
      %v876 = vsel %vm422, %v866, 0
      %878 = vmatprep.subr.mxu0 %v876
      %879 = vmatpush1.msra.mxu0 %v873
      %880 = vmatprep.subr.mxu0 0.0
      %881 = vmatpush1.msra.mxu0 0.0
      %882 = vmatprep.subr.mxu0 0.0
      %883 = vmatpush1.msra.mxu0 0.0
      %884 = vmatprep.subr.mxu0 0.0
      %885 = vmatpush1.msra.mxu0 0.0
      %886 = vmatprep.subr.mxu0 0.0
      %887 = vmatpush1.msra.mxu0 0.0
      %888 = vmatprep.subr.mxu0 0.0
      %889 = vmatpush1.msra.mxu0 0.0
      %890 = vmatprep.subr.mxu0 0.0
      %891 = vmatpush1.msra.mxu0 0.0
      %892 = vmatprep.subr.mxu0 0.0
      %893 = vmatpush1.msra.mxu0 0.0
      %894 = vmatprep.subr.mxu0 0.0
      %895 = vmatpush1.msra.mxu0 0.0
      %896 = vmatprep.subr.mxu0 0.0
      %897 = vmatpush1.msra.mxu0 0.0
      %898 = vmatprep.subr.mxu0 0.0
      %899 = vmatpush1.msra.mxu0 0.0
      %900 = vmatprep.subr.mxu0 0.0
      %901 = vmatpush1.msra.mxu0 0.0
      %902 = vmatprep.subr.mxu0 0.0
      %903 = vmatpush1.msra.mxu0 0.0
      %904 = vmatprep.subr.mxu0 0.0
      %905 = vmatpush1.msra.mxu0 0.0
      %906 = vmatprep.subr.mxu0 0.0
      %907 = vmatpush1.msra.mxu0 0.0
      %908 = vmatprep.subr.mxu0 0.0
      %909 = vmatpush1.msra.mxu0 0.0
      %910 = vmatprep.subr.mxu0 0.0
      %911 = vmatpush1.msra.mxu0 0.0
      %912 = vmatprep.subr.mxu0 0.0
      %913 = vmatpush1.msra.mxu0 0.0
      %914 = vmatprep.subr.mxu0 0.0
      %915 = vmatpush1.msra.mxu0 0.0
      %916 = vmatprep.subr.mxu0 0.0
      %917 = vmatpush1.msra.mxu0 0.0
      %918 = vmatprep.subr.mxu0 0.0
      %919 = vmatpush1.msra.mxu0 0.0
      %920 = vmatprep.subr.mxu0 0.0
      %921 = vmatpush1.msra.mxu0 0.0
      %922 = vmatprep.subr.mxu0 0.0
      %923 = vmatpush1.msra.mxu0 0.0
      %924 = vmatprep.subr.mxu0 0.0
      %925 = vmatpush1.msra.mxu0 0.0
      %926 = vmatprep.subr.mxu0 0.0
      %927 = vmatpush1.msra.mxu0 0.0
      %928 = vmatprep.subr.mxu0 0.0
      %929 = vmatpush1.msra.mxu0 0.0
      %930 = vmatprep.subr.mxu0 0.0
      %931 = vmatpush1.msra.mxu0 0.0
      %932 = vmatprep.subr.mxu0 0.0
      %933 = vmatpush1.msra.mxu0 0.0
      %934 = vmatprep.subr.mxu0 0.0
      %935 = vmatpush1.msra.mxu0 0.0
      %936 = vmatprep.subr.mxu0 0.0
      %937 = vmatpush1.msra.mxu0 0.0
      %938 = vmatprep.subr.mxu0 0.0
      %939 = vmatpush1.msra.mxu0 0.0
      %940 = vmatprep.subr.mxu0 0.0
      %941 = vmatpush1.msra.mxu0 0.0
      %942 = vmatprep.mubr.f32.mxu0 0.0
      %943 = vmatmul.mubr.f32.gmra.mrb[0].mxu0 %v870
      %v944 = vpop.f32.mrb[0].mxu0
      %v945 = vadd.f32 0.0, %v944
      %v946 = vpop.f32.mrb[0].mxu0
      %v947 = vadd.f32 0.0, %v946
      %948 = vdwg.mxu0
      %v949 = vadd.f32 %v852, %v945
      %v950 = vadd.f32 %v853, %v947
      %951 = vrot.lane.b32.xlu0 %v358, 113
      %v952 = vpop.permute.xlu0 %951
      %953 = vrot.lane.b32.xlu0 %v391, 113
      %v954 = vpop.permute.xlu0 %953
      %955 = vrot.lane.b32.xlu0 0.0, 113
      %v956 = vpop.permute.xlu0 %955
      %vm957 = vcmask 924672
      %v958 = vsel %vm957, %v952, %v954
      %v959 = vsel %vm957, %v954, %v956
      %v962 = vsel %vm386, %v958, 0.0
      %v963 = vsel %vm387, %v959, 0.0
      %s964 = scalar_lea.vmem %s1, 48
      %v965 = vld [vmem:[%s964] sm:$0xff]
      %v967 = vsel %vm418, %v965, 0
      %v970 = vsel %vm422, %v962, 0
      %v973 = vsel %vm422, %v963, 0
      %975 = vmatprep.subr.mxu0 %v973
      %976 = vmatpush1.msra.mxu0 %v970
      %977 = vmatprep.subr.mxu0 0.0
      %978 = vmatpush1.msra.mxu0 0.0
      %979 = vmatprep.subr.mxu0 0.0
      %980 = vmatpush1.msra.mxu0 0.0
      %981 = vmatprep.subr.mxu0 0.0
      %982 = vmatpush1.msra.mxu0 0.0
      %983 = vmatprep.subr.mxu0 0.0
      %984 = vmatpush1.msra.mxu0 0.0
      %985 = vmatprep.subr.mxu0 0.0
      %986 = vmatpush1.msra.mxu0 0.0
      %987 = vmatprep.subr.mxu0 0.0
      %988 = vmatpush1.msra.mxu0 0.0
      %989 = vmatprep.subr.mxu0 0.0
      %990 = vmatpush1.msra.mxu0 0.0
      %991 = vmatprep.subr.mxu0 0.0
      %992 = vmatpush1.msra.mxu0 0.0
      %993 = vmatprep.subr.mxu0 0.0
      %994 = vmatpush1.msra.mxu0 0.0
      %995 = vmatprep.subr.mxu0 0.0
      %996 = vmatpush1.msra.mxu0 0.0
      %997 = vmatprep.subr.mxu0 0.0
      %998 = vmatpush1.msra.mxu0 0.0
      %999 = vmatprep.subr.mxu0 0.0
      %1000 = vmatpush1.msra.mxu0 0.0
      %1001 = vmatprep.subr.mxu0 0.0
      %1002 = vmatpush1.msra.mxu0 0.0
      %1003 = vmatprep.subr.mxu0 0.0
      %1004 = vmatpush1.msra.mxu0 0.0
      %1005 = vmatprep.subr.mxu0 0.0
      %1006 = vmatpush1.msra.mxu0 0.0
      %1007 = vmatprep.subr.mxu0 0.0
      %1008 = vmatpush1.msra.mxu0 0.0
      %1009 = vmatprep.subr.mxu0 0.0
      %1010 = vmatpush1.msra.mxu0 0.0
      %1011 = vmatprep.subr.mxu0 0.0
      %1012 = vmatpush1.msra.mxu0 0.0
      %1013 = vmatprep.subr.mxu0 0.0
      %1014 = vmatpush1.msra.mxu0 0.0
      %1015 = vmatprep.subr.mxu0 0.0
      %1016 = vmatpush1.msra.mxu0 0.0
      %1017 = vmatprep.subr.mxu0 0.0
      %1018 = vmatpush1.msra.mxu0 0.0
      %1019 = vmatprep.subr.mxu0 0.0
      %1020 = vmatpush1.msra.mxu0 0.0
      %1021 = vmatprep.subr.mxu0 0.0
      %1022 = vmatpush1.msra.mxu0 0.0
      %1023 = vmatprep.subr.mxu0 0.0
      %1024 = vmatpush1.msra.mxu0 0.0
      %1025 = vmatprep.subr.mxu0 0.0
      %1026 = vmatpush1.msra.mxu0 0.0
      %1027 = vmatprep.subr.mxu0 0.0
      %1028 = vmatpush1.msra.mxu0 0.0
      %1029 = vmatprep.subr.mxu0 0.0
      %1030 = vmatpush1.msra.mxu0 0.0
      %1031 = vmatprep.subr.mxu0 0.0
      %1032 = vmatpush1.msra.mxu0 0.0
      %1033 = vmatprep.subr.mxu0 0.0
      %1034 = vmatpush1.msra.mxu0 0.0
      %1035 = vmatprep.subr.mxu0 0.0
      %1036 = vmatpush1.msra.mxu0 0.0
      %1037 = vmatprep.subr.mxu0 0.0
      %1038 = vmatpush1.msra.mxu0 0.0
      %1039 = vmatprep.mubr.f32.mxu0 0.0
      %1040 = vmatmul.mubr.f32.gmra.mrb[0].mxu0 %v967
      %v1041 = vpop.f32.mrb[0].mxu0
      %v1042 = vadd.f32 0.0, %v1041
      %v1043 = vpop.f32.mrb[0].mxu0
      %v1044 = vadd.f32 0.0, %v1043
      %1045 = vdwg.mxu0
      %v1046 = vadd.f32 %v949, %v1042
      %v1047 = vadd.f32 %v950, %v1044
      %s1048 = scalar_lea.vmem %s1, 56
      %v1049 = vld [vmem:[%s1048] sm:$0xff]
      %1050 = vrot.lane.b32.xlu0 %v358, 112
      %v1051 = vpop.permute.xlu0 %1050
      %1052 = vrot.lane.b32.xlu0 %v391, 112
      %v1053 = vpop.permute.xlu0 %1052
      %1054 = vrot.lane.b32.xlu0 0.0, 112
      %v1055 = vpop.permute.xlu0 %1054
      %vm1056 = vcmask 916480
      %v1057 = vsel %vm1056, %v1051, %v1053
      %v1058 = vsel %vm1056, %v1053, %v1055
      %v1060 = vsel %vm418, %v1049, 0
      %v1062 = vsel %vm422, %v1057, 0
      %v1064 = vsel %vm422, %v1058, 0
      %1066 = vmatprep.subr.mxu0 %v1064
      %1067 = vmatpush1.msra.mxu0 %v1062
      %1068 = vmatprep.subr.mxu0 0.0
      %1069 = vmatpush1.msra.mxu0 0.0
      %1070 = vmatprep.subr.mxu0 0.0
      %1071 = vmatpush1.msra.mxu0 0.0
      %1072 = vmatprep.subr.mxu0 0.0
      %1073 = vmatpush1.msra.mxu0 0.0
      %1074 = vmatprep.subr.mxu0 0.0
      %1075 = vmatpush1.msra.mxu0 0.0
      %1076 = vmatprep.subr.mxu0 0.0
      %1077 = vmatpush1.msra.mxu0 0.0
      %1078 = vmatprep.subr.mxu0 0.0
      %1079 = vmatpush1.msra.mxu0 0.0
      %1080 = vmatprep.subr.mxu0 0.0
      %1081 = vmatpush1.msra.mxu0 0.0
      %1082 = vmatprep.subr.mxu0 0.0
      %1083 = vmatpush1.msra.mxu0 0.0
      %1084 = vmatprep.subr.mxu0 0.0
      %1085 = vmatpush1.msra.mxu0 0.0
      %1086 = vmatprep.subr.mxu0 0.0
      %1087 = vmatpush1.msra.mxu0 0.0
      %1088 = vmatprep.subr.mxu0 0.0
      %1089 = vmatpush1.msra.mxu0 0.0
      %1090 = vmatprep.subr.mxu0 0.0
      %1091 = vmatpush1.msra.mxu0 0.0
      %1092 = vmatprep.subr.mxu0 0.0
      %1093 = vmatpush1.msra.mxu0 0.0
      %1094 = vmatprep.subr.mxu0 0.0
      %1095 = vmatpush1.msra.mxu0 0.0
      %1096 = vmatprep.subr.mxu0 0.0
      %1097 = vmatpush1.msra.mxu0 0.0
      %1098 = vmatprep.subr.mxu0 0.0
      %1099 = vmatpush1.msra.mxu0 0.0
      %1100 = vmatprep.subr.mxu0 0.0
      %1101 = vmatpush1.msra.mxu0 0.0
      %1102 = vmatprep.subr.mxu0 0.0
      %1103 = vmatpush1.msra.mxu0 0.0
      %1104 = vmatprep.subr.mxu0 0.0
      %1105 = vmatpush1.msra.mxu0 0.0
      %1106 = vmatprep.subr.mxu0 0.0
      %1107 = vmatpush1.msra.mxu0 0.0
      %1108 = vmatprep.subr.mxu0 0.0
      %1109 = vmatpush1.msra.mxu0 0.0
      %1110 = vmatprep.subr.mxu0 0.0
      %1111 = vmatpush1.msra.mxu0 0.0
      %1112 = vmatprep.subr.mxu0 0.0
      %1113 = vmatpush1.msra.mxu0 0.0
      %1114 = vmatprep.subr.mxu0 0.0
      %1115 = vmatpush1.msra.mxu0 0.0
      %1116 = vmatprep.subr.mxu0 0.0
      %1117 = vmatpush1.msra.mxu0 0.0
      %1118 = vmatprep.subr.mxu0 0.0
      %1119 = vmatpush1.msra.mxu0 0.0
      %1120 = vmatprep.subr.mxu0 0.0
      %1121 = vmatpush1.msra.mxu0 0.0
      %1122 = vmatprep.subr.mxu0 0.0
      %1123 = vmatpush1.msra.mxu0 0.0
      %1124 = vmatprep.subr.mxu0 0.0
      %1125 = vmatpush1.msra.mxu0 0.0
      %1126 = vmatprep.subr.mxu0 0.0
      %1127 = vmatpush1.msra.mxu0 0.0
      %1128 = vmatprep.subr.mxu0 0.0
      %1129 = vmatpush1.msra.mxu0 0.0
      %1130 = vmatprep.mubr.f32.mxu0 0.0
      %1131 = vmatmul.mubr.f32.gmra.mrb[0].mxu0 %v1060
      %v1132 = vpop.f32.mrb[0].mxu0
      %v1133 = vadd.f32 0.0, %v1132
      %v1134 = vpop.f32.mrb[0].mxu0
      %v1135 = vadd.f32 0.0, %v1134
      %1136 = vdwg.mxu0
      %v1137 = vadd.f32 %v1046, %v1133
      %v1138 = vadd.f32 %v1047, %v1135
      %1139 = vrot.lane.b32.xlu0 %v358, 111
      %v1140 = vpop.permute.xlu0 %1139
      %1141 = vrot.lane.b32.xlu0 %v391, 111
      %v1142 = vpop.permute.xlu0 %1141
      %1143 = vrot.lane.b32.xlu0 0.0, 111
      %v1144 = vpop.permute.xlu0 %1143
      %vm1145 = vcmask 908288
      %v1146 = vsel %vm1145, %v1140, %v1142
      %v1147 = vsel %vm1145, %v1142, %v1144
      %v1150 = vsel %vm388, %v1146, 0.0
      %v1151 = vsel %vm389, %v1147, 0.0
      %s1152 = scalar_lea.vmem %s1, 64
      %v1153 = vld [vmem:[%s1152] sm:$0xff]
      %v1155 = vsel %vm418, %v1153, 0
      %v1158 = vsel %vm422, %v1150, 0
      %v1161 = vsel %vm422, %v1151, 0
      %1163 = vmatprep.subr.mxu0 %v1161
      %1164 = vmatpush1.msra.mxu0 %v1158
      %1165 = vmatprep.subr.mxu0 0.0
      %1166 = vmatpush1.msra.mxu0 0.0
      %1167 = vmatprep.subr.mxu0 0.0
      %1168 = vmatpush1.msra.mxu0 0.0
      %1169 = vmatprep.subr.mxu0 0.0
      %1170 = vmatpush1.msra.mxu0 0.0
      %1171 = vmatprep.subr.mxu0 0.0
      %1172 = vmatpush1.msra.mxu0 0.0
      %1173 = vmatprep.subr.mxu0 0.0
      %1174 = vmatpush1.msra.mxu0 0.0
      %1175 = vmatprep.subr.mxu0 0.0
      %1176 = vmatpush1.msra.mxu0 0.0
      %1177 = vmatprep.subr.mxu0 0.0
      %1178 = vmatpush1.msra.mxu0 0.0
      %1179 = vmatprep.subr.mxu0 0.0
      %1180 = vmatpush1.msra.mxu0 0.0
      %1181 = vmatprep.subr.mxu0 0.0
      %1182 = vmatpush1.msra.mxu0 0.0
      %1183 = vmatprep.subr.mxu0 0.0
      %1184 = vmatpush1.msra.mxu0 0.0
      %1185 = vmatprep.subr.mxu0 0.0
      %1186 = vmatpush1.msra.mxu0 0.0
      %1187 = vmatprep.subr.mxu0 0.0
      %1188 = vmatpush1.msra.mxu0 0.0
      %1189 = vmatprep.subr.mxu0 0.0
      %1190 = vmatpush1.msra.mxu0 0.0
      %1191 = vmatprep.subr.mxu0 0.0
      %1192 = vmatpush1.msra.mxu0 0.0
      %1193 = vmatprep.subr.mxu0 0.0
      %1194 = vmatpush1.msra.mxu0 0.0
      %1195 = vmatprep.subr.mxu0 0.0
      %1196 = vmatpush1.msra.mxu0 0.0
      %1197 = vmatprep.subr.mxu0 0.0
      %1198 = vmatpush1.msra.mxu0 0.0
      %1199 = vmatprep.subr.mxu0 0.0
      %1200 = vmatpush1.msra.mxu0 0.0
      %1201 = vmatprep.subr.mxu0 0.0
      %1202 = vmatpush1.msra.mxu0 0.0
      %1203 = vmatprep.subr.mxu0 0.0
      %1204 = vmatpush1.msra.mxu0 0.0
      %1205 = vmatprep.subr.mxu0 0.0
      %1206 = vmatpush1.msra.mxu0 0.0
      %1207 = vmatprep.subr.mxu0 0.0
      %1208 = vmatpush1.msra.mxu0 0.0
      %1209 = vmatprep.subr.mxu0 0.0
      %1210 = vmatpush1.msra.mxu0 0.0
      %1211 = vmatprep.subr.mxu0 0.0
      %1212 = vmatpush1.msra.mxu0 0.0
      %1213 = vmatprep.subr.mxu0 0.0
      %1214 = vmatpush1.msra.mxu0 0.0
      %1215 = vmatprep.subr.mxu0 0.0
      %1216 = vmatpush1.msra.mxu0 0.0
      %1217 = vmatprep.subr.mxu0 0.0
      %1218 = vmatpush1.msra.mxu0 0.0
      %1219 = vmatprep.subr.mxu0 0.0
      %1220 = vmatpush1.msra.mxu0 0.0
      %1221 = vmatprep.subr.mxu0 0.0
      %1222 = vmatpush1.msra.mxu0 0.0
      %1223 = vmatprep.subr.mxu0 0.0
      %1224 = vmatpush1.msra.mxu0 0.0
      %1225 = vmatprep.subr.mxu0 0.0
      %1226 = vmatpush1.msra.mxu0 0.0
      %1227 = vmatprep.mubr.f32.mxu0 0.0
      %1228 = vmatmul.mubr.f32.gmra.mrb[0].mxu0 %v1155
      %v1229 = vpop.f32.mrb[0].mxu0
      %v1230 = vadd.f32 0.0, %v1229
      %v1231 = vpop.f32.mrb[0].mxu0
      %v1232 = vadd.f32 0.0, %v1231
      %1233 = vdwg.mxu0
      %v1234 = vadd.f32 %v1137, %v1230
      %v1235 = vadd.f32 %v1138, %v1232
      %v1236 = vld [vmem:[%s2] sm:$0xff]
      %1238 = vset.pattern.permute.xlu0 0
      %1239 = vperm.xlu0 %1238, %v1236
      %v1240 = vpop.permute.xlu0 %1239
      %v1242 = vadd.f32 %v1234, %v1240
      %v1243 = vadd.f32 %v1235, %v1240
      %v1244 = vmax.f32 %v1242, 0.0
      %v1245 = vmax.f32 %v1243, 0.0
      %1248 = vrot.lane.b32.xlu0 %v1244, 17
      %v1249 = vpop.permute.xlu0 %1248
      %1250 = vrot.lane.b32.xlu0 %v1245, 17
      %v1251 = vpop.permute.xlu0 %1250
      %v1252 = vsel %vm399, %v394, %v1249
      %v1253 = vsel %vm399, %v1249, %v1251
      %v1256 = vsel %vm386, %v1252, 0.0
      %v1257 = vsel %vm387, %v1253, 0.0
      %v1258 = vld [vmem:[%s3] sm:$0xff]
      %v1259 = vld [vmem:[%s3 + $0x8] sm:$0xff]
      %s1260 = scalar_lea.vmem %s3, 16
      %v1261 = vld [vmem:[%s1260] sm:$0xff]
      %v1262 = vld [vmem:[%s1260 + $0x8] sm:$0xff]
      %1263 = vrot.lane.b32.xlu0 %v1244, 16
      %v1264 = vpop.permute.xlu0 %1263
      %1265 = vrot.lane.b32.xlu0 %v1245, 16
      %v1266 = vpop.permute.xlu0 %1265
      %v1267 = vsel %vm415, %v410, %v1264
      %v1268 = vsel %vm415, %v1264, %v1266
      %vm1271 = vcmask 64512
      %v1273 = vsel %vm1271, %v1261, 0
      %v1276 = vsel %vm1271, %v1262, 0
      %1278 = vmatprep.subr.mxu0 %v1268
      %1279 = vmatpush1.msra.mxu0 %v1267
      %1280 = vmatprep.subr.mxu0 0.0
      %1281 = vmatpush1.msra.mxu0 0.0
      %1282 = vmatprep.subr.mxu0 0.0
      %1283 = vmatpush1.msra.mxu0 0.0
      %1284 = vmatprep.subr.mxu0 0.0
      %1285 = vmatpush1.msra.mxu0 0.0
      %1286 = vmatprep.subr.mxu0 0.0
      %1287 = vmatpush1.msra.mxu0 0.0
      %1288 = vmatprep.subr.mxu0 0.0
      %1289 = vmatpush1.msra.mxu0 0.0
      %1290 = vmatprep.subr.mxu0 0.0
      %1291 = vmatpush1.msra.mxu0 0.0
      %1292 = vmatprep.subr.mxu0 0.0
      %1293 = vmatpush1.msra.mxu0 0.0
      %1294 = vmatprep.subr.mxu0 0.0
      %1295 = vmatpush1.msra.mxu0 0.0
      %1296 = vmatprep.subr.mxu0 0.0
      %1297 = vmatpush1.msra.mxu0 0.0
      %1298 = vmatprep.subr.mxu0 0.0
      %1299 = vmatpush1.msra.mxu0 0.0
      %1300 = vmatprep.subr.mxu0 0.0
      %1301 = vmatpush1.msra.mxu0 0.0
      %1302 = vmatprep.subr.mxu0 0.0
      %1303 = vmatpush1.msra.mxu0 0.0
      %1304 = vmatprep.subr.mxu0 0.0
      %1305 = vmatpush1.msra.mxu0 0.0
      %1306 = vmatprep.subr.mxu0 0.0
      %1307 = vmatpush1.msra.mxu0 0.0
      %1308 = vmatprep.subr.mxu0 0.0
      %1309 = vmatpush1.msra.mxu0 0.0
      %1310 = vmatprep.subr.mxu0 0.0
      %1311 = vmatpush1.msra.mxu0 0.0
      %1312 = vmatprep.subr.mxu0 0.0
      %1313 = vmatpush1.msra.mxu0 0.0
      %1314 = vmatprep.subr.mxu0 0.0
      %1315 = vmatpush1.msra.mxu0 0.0
      %1316 = vmatprep.subr.mxu0 0.0
      %1317 = vmatpush1.msra.mxu0 0.0
      %1318 = vmatprep.subr.mxu0 0.0
      %1319 = vmatpush1.msra.mxu0 0.0
      %1320 = vmatprep.subr.mxu0 0.0
      %1321 = vmatpush1.msra.mxu0 0.0
      %1322 = vmatprep.subr.mxu0 0.0
      %1323 = vmatpush1.msra.mxu0 0.0
      %1324 = vmatprep.subr.mxu0 0.0
      %1325 = vmatpush1.msra.mxu0 0.0
      %1326 = vmatprep.subr.mxu0 0.0
      %1327 = vmatpush1.msra.mxu0 0.0
      %1328 = vmatprep.subr.mxu0 0.0
      %1329 = vmatpush1.msra.mxu0 0.0
      %1330 = vmatprep.subr.mxu0 0.0
      %1331 = vmatpush1.msra.mxu0 0.0
      %1332 = vmatprep.subr.mxu0 0.0
      %1333 = vmatpush1.msra.mxu0 0.0
      %1334 = vmatprep.subr.mxu0 0.0
      %1335 = vmatpush1.msra.mxu0 0.0
      %1336 = vmatprep.subr.mxu0 0.0
      %1337 = vmatpush1.msra.mxu0 0.0
      %1338 = vmatprep.subr.mxu0 0.0
      %1339 = vmatpush1.msra.mxu0 0.0
      %1340 = vmatprep.subr.mxu0 0.0
      %1341 = vmatpush1.msra.mxu0 0.0
      %1342 = vmatprep.mubr.f32.mxu0 0.0
      %1343 = vmatmul.mubr.f32.gmra.mrb[0].mxu0 %v1273
      %v1344 = vpop.f32.mrb[0].mxu0
      %v1345 = vadd.f32 0.0, %v1344
      %v1346 = vpop.f32.mrb[0].mxu0
      %v1347 = vadd.f32 0.0, %v1346
      %1348 = vmatprep.mubr.f32.mxu0 0.0
      %1349 = vmatmul.mubr.f32.gmra.mrb[0].mxu0 %v1276
      %v1350 = vpop.f32.mrb[0].mxu0
      %v1351 = vadd.f32 0.0, %v1350
      %v1352 = vpop.f32.mrb[0].mxu0
      %v1353 = vadd.f32 0.0, %v1352
      %1354 = vdwg.mxu0
      %v1356 = vsel %vm1271, %v1258, 0
      %v1359 = vsel %vm1271, %v1259, 0
      %1361 = vmatprep.subr.mxu0 %v1257
      %1362 = vmatpush1.msra.mxu0 %v1256
      %1363 = vmatprep.subr.mxu0 0.0
      %1364 = vmatpush1.msra.mxu0 0.0
      %1365 = vmatprep.subr.mxu0 0.0
      %1366 = vmatpush1.msra.mxu0 0.0
      %1367 = vmatprep.subr.mxu0 0.0
      %1368 = vmatpush1.msra.mxu0 0.0
      %1369 = vmatprep.subr.mxu0 0.0
      %1370 = vmatpush1.msra.mxu0 0.0
      %1371 = vmatprep.subr.mxu0 0.0
      %1372 = vmatpush1.msra.mxu0 0.0
      %1373 = vmatprep.subr.mxu0 0.0
      %1374 = vmatpush1.msra.mxu0 0.0
      %1375 = vmatprep.subr.mxu0 0.0
      %1376 = vmatpush1.msra.mxu0 0.0
      %1377 = vmatprep.subr.mxu0 0.0
      %1378 = vmatpush1.msra.mxu0 0.0
      %1379 = vmatprep.subr.mxu0 0.0
      %1380 = vmatpush1.msra.mxu0 0.0
      %1381 = vmatprep.subr.mxu0 0.0
      %1382 = vmatpush1.msra.mxu0 0.0
      %1383 = vmatprep.subr.mxu0 0.0
      %1384 = vmatpush1.msra.mxu0 0.0
      %1385 = vmatprep.subr.mxu0 0.0
      %1386 = vmatpush1.msra.mxu0 0.0
      %1387 = vmatprep.subr.mxu0 0.0
      %1388 = vmatpush1.msra.mxu0 0.0
      %1389 = vmatprep.subr.mxu0 0.0
      %1390 = vmatpush1.msra.mxu0 0.0
      %1391 = vmatprep.subr.mxu0 0.0
      %1392 = vmatpush1.msra.mxu0 0.0
      %1393 = vmatprep.subr.mxu0 0.0
      %1394 = vmatpush1.msra.mxu0 0.0
      %1395 = vmatprep.subr.mxu0 0.0
      %1396 = vmatpush1.msra.mxu0 0.0
      %1397 = vmatprep.subr.mxu0 0.0
      %1398 = vmatpush1.msra.mxu0 0.0
      %1399 = vmatprep.subr.mxu0 0.0
      %1400 = vmatpush1.msra.mxu0 0.0
      %1401 = vmatprep.subr.mxu0 0.0
      %1402 = vmatpush1.msra.mxu0 0.0
      %1403 = vmatprep.subr.mxu0 0.0
      %1404 = vmatpush1.msra.mxu0 0.0
      %1405 = vmatprep.subr.mxu0 0.0
      %1406 = vmatpush1.msra.mxu0 0.0
      %1407 = vmatprep.subr.mxu0 0.0
      %1408 = vmatpush1.msra.mxu0 0.0
      %1409 = vmatprep.subr.mxu0 0.0
      %1410 = vmatpush1.msra.mxu0 0.0
      %1411 = vmatprep.subr.mxu0 0.0
      %1412 = vmatpush1.msra.mxu0 0.0
      %1413 = vmatprep.subr.mxu0 0.0
      %1414 = vmatpush1.msra.mxu0 0.0
      %1415 = vmatprep.subr.mxu0 0.0
      %1416 = vmatpush1.msra.mxu0 0.0
      %1417 = vmatprep.subr.mxu0 0.0
      %1418 = vmatpush1.msra.mxu0 0.0
      %1419 = vmatprep.subr.mxu0 0.0
      %1420 = vmatpush1.msra.mxu0 0.0
      %1421 = vmatprep.subr.mxu0 0.0
      %1422 = vmatpush1.msra.mxu0 0.0
      %1423 = vmatprep.subr.mxu0 0.0
      %1424 = vmatpush1.msra.mxu0 0.0
      %1425 = vmatprep.mubr.f32.mxu0 0.0
      %1426 = vmatmul.mubr.f32.gmra.mrb[0].mxu0 %v1356
      %v1427 = vpop.f32.mrb[0].mxu0
      %v1428 = vadd.f32 %v1345, %v1427
      %v1429 = vpop.f32.mrb[0].mxu0
      %v1430 = vadd.f32 %v1347, %v1429
      %1431 = vmatprep.mubr.f32.mxu0 0.0
      %1432 = vmatmul.mubr.f32.gmra.mrb[0].mxu0 %v1359
      %v1433 = vpop.f32.mrb[0].mxu0
      %v1434 = vadd.f32 %v1351, %v1433
      %v1435 = vpop.f32.mrb[0].mxu0
      %v1436 = vadd.f32 %v1353, %v1435
      %1437 = vdwg.mxu0
      %1438 = vrot.lane.b32.xlu0 %v1244, 15
      %v1439 = vpop.permute.xlu0 %1438
      %1440 = vrot.lane.b32.xlu0 %v1245, 15
      %v1441 = vpop.permute.xlu0 %1440
      %v1442 = vsel %vm584, %v579, %v1439
      %v1443 = vsel %vm584, %v1439, %v1441
      %v1446 = vsel %vm388, %v1442, 0.0
      %v1447 = vsel %vm389, %v1443, 0.0
      %s1448 = scalar_lea.vmem %s3, 32
      %v1449 = vld [vmem:[%s1448] sm:$0xff]
      %v1450 = vld [vmem:[%s1448 + $0x8] sm:$0xff]
      %v1452 = vsel %vm1271, %v1449, 0
      %v1455 = vsel %vm1271, %v1450, 0
      %1457 = vmatprep.subr.mxu0 %v1447
      %1458 = vmatpush1.msra.mxu0 %v1446
      %1459 = vmatprep.subr.mxu0 0.0
      %1460 = vmatpush1.msra.mxu0 0.0
      %1461 = vmatprep.subr.mxu0 0.0
      %1462 = vmatpush1.msra.mxu0 0.0
      %1463 = vmatprep.subr.mxu0 0.0
      %1464 = vmatpush1.msra.mxu0 0.0
      %1465 = vmatprep.subr.mxu0 0.0
      %1466 = vmatpush1.msra.mxu0 0.0
      %1467 = vmatprep.subr.mxu0 0.0
      %1468 = vmatpush1.msra.mxu0 0.0
      %1469 = vmatprep.subr.mxu0 0.0
      %1470 = vmatpush1.msra.mxu0 0.0
      %1471 = vmatprep.subr.mxu0 0.0
      %1472 = vmatpush1.msra.mxu0 0.0
      %1473 = vmatprep.subr.mxu0 0.0
      %1474 = vmatpush1.msra.mxu0 0.0
      %1475 = vmatprep.subr.mxu0 0.0
      %1476 = vmatpush1.msra.mxu0 0.0
      %1477 = vmatprep.subr.mxu0 0.0
      %1478 = vmatpush1.msra.mxu0 0.0
      %1479 = vmatprep.subr.mxu0 0.0
      %1480 = vmatpush1.msra.mxu0 0.0
      %1481 = vmatprep.subr.mxu0 0.0
      %1482 = vmatpush1.msra.mxu0 0.0
      %1483 = vmatprep.subr.mxu0 0.0
      %1484 = vmatpush1.msra.mxu0 0.0
      %1485 = vmatprep.subr.mxu0 0.0
      %1486 = vmatpush1.msra.mxu0 0.0
      %1487 = vmatprep.subr.mxu0 0.0
      %1488 = vmatpush1.msra.mxu0 0.0
      %1489 = vmatprep.subr.mxu0 0.0
      %1490 = vmatpush1.msra.mxu0 0.0
      %1491 = vmatprep.subr.mxu0 0.0
      %1492 = vmatpush1.msra.mxu0 0.0
      %1493 = vmatprep.subr.mxu0 0.0
      %1494 = vmatpush1.msra.mxu0 0.0
      %1495 = vmatprep.subr.mxu0 0.0
      %1496 = vmatpush1.msra.mxu0 0.0
      %1497 = vmatprep.subr.mxu0 0.0
      %1498 = vmatpush1.msra.mxu0 0.0
      %1499 = vmatprep.subr.mxu0 0.0
      %1500 = vmatpush1.msra.mxu0 0.0
      %1501 = vmatprep.subr.mxu0 0.0
      %1502 = vmatpush1.msra.mxu0 0.0
      %1503 = vmatprep.subr.mxu0 0.0
      %1504 = vmatpush1.msra.mxu0 0.0
      %1505 = vmatprep.subr.mxu0 0.0
      %1506 = vmatpush1.msra.mxu0 0.0
      %1507 = vmatprep.subr.mxu0 0.0
      %1508 = vmatpush1.msra.mxu0 0.0
      %1509 = vmatprep.subr.mxu0 0.0
      %1510 = vmatpush1.msra.mxu0 0.0
      %1511 = vmatprep.subr.mxu0 0.0
      %1512 = vmatpush1.msra.mxu0 0.0
      %1513 = vmatprep.subr.mxu0 0.0
      %1514 = vmatpush1.msra.mxu0 0.0
      %1515 = vmatprep.subr.mxu0 0.0
      %1516 = vmatpush1.msra.mxu0 0.0
      %1517 = vmatprep.subr.mxu0 0.0
      %1518 = vmatpush1.msra.mxu0 0.0
      %1519 = vmatprep.subr.mxu0 0.0
      %1520 = vmatpush1.msra.mxu0 0.0
      %1521 = vmatprep.mubr.f32.mxu0 0.0
      %1522 = vmatmul.mubr.f32.gmra.mrb[0].mxu0 %v1452
      %v1523 = vpop.f32.mrb[0].mxu0
      %v1524 = vadd.f32 0.0, %v1523
      %v1525 = vpop.f32.mrb[0].mxu0
      %v1526 = vadd.f32 0.0, %v1525
      %1527 = vmatprep.mubr.f32.mxu0 0.0
      %1528 = vmatmul.mubr.f32.gmra.mrb[0].mxu0 %v1455
      %v1529 = vpop.f32.mrb[0].mxu0
      %v1530 = vadd.f32 0.0, %v1529
      %v1531 = vpop.f32.mrb[0].mxu0
      %v1532 = vadd.f32 0.0, %v1531
      %1533 = vdwg.mxu0
      %v1534 = vadd.f32 %v1428, %v1524
      %v1535 = vadd.f32 %v1430, %v1526
      %v1536 = vadd.f32 %v1434, %v1530
      %v1537 = vadd.f32 %v1436, %v1532
      %1538 = vrot.lane.b32.xlu0 %v1244, 1
      %v1539 = vpop.permute.xlu0 %1538
      %1540 = vrot.lane.b32.xlu0 %v1245, 1
      %v1541 = vpop.permute.xlu0 %1540
      %v1542 = vsel %vm681, %v676, %v1539
      %v1543 = vsel %vm681, %v1539, %v1541
      %v1546 = vsel %vm386, %v1542, 0.0
      %v1547 = vsel %vm387, %v1543, 0.0
      %s1548 = scalar_lea.vmem %s3, 48
      %v1549 = vld [vmem:[%s1548] sm:$0xff]
      %v1550 = vld [vmem:[%s1548 + $0x8] sm:$0xff]
      %v1552 = vsel %vm1271, %v1549, 0
      %v1555 = vsel %vm1271, %v1550, 0
      %1557 = vmatprep.subr.mxu0 %v1547
      %1558 = vmatpush1.msra.mxu0 %v1546
      %1559 = vmatprep.subr.mxu0 0.0
      %1560 = vmatpush1.msra.mxu0 0.0
      %1561 = vmatprep.subr.mxu0 0.0
      %1562 = vmatpush1.msra.mxu0 0.0
      %1563 = vmatprep.subr.mxu0 0.0
      %1564 = vmatpush1.msra.mxu0 0.0
      %1565 = vmatprep.subr.mxu0 0.0
      %1566 = vmatpush1.msra.mxu0 0.0
      %1567 = vmatprep.subr.mxu0 0.0
      %1568 = vmatpush1.msra.mxu0 0.0
      %1569 = vmatprep.subr.mxu0 0.0
      %1570 = vmatpush1.msra.mxu0 0.0
      %1571 = vmatprep.subr.mxu0 0.0
      %1572 = vmatpush1.msra.mxu0 0.0
      %1573 = vmatprep.subr.mxu0 0.0
      %1574 = vmatpush1.msra.mxu0 0.0
      %1575 = vmatprep.subr.mxu0 0.0
      %1576 = vmatpush1.msra.mxu0 0.0
      %1577 = vmatprep.subr.mxu0 0.0
      %1578 = vmatpush1.msra.mxu0 0.0
      %1579 = vmatprep.subr.mxu0 0.0
      %1580 = vmatpush1.msra.mxu0 0.0
      %1581 = vmatprep.subr.mxu0 0.0
      %1582 = vmatpush1.msra.mxu0 0.0
      %1583 = vmatprep.subr.mxu0 0.0
      %1584 = vmatpush1.msra.mxu0 0.0
      %1585 = vmatprep.subr.mxu0 0.0
      %1586 = vmatpush1.msra.mxu0 0.0
      %1587 = vmatprep.subr.mxu0 0.0
      %1588 = vmatpush1.msra.mxu0 0.0
      %1589 = vmatprep.subr.mxu0 0.0
      %1590 = vmatpush1.msra.mxu0 0.0
      %1591 = vmatprep.subr.mxu0 0.0
      %1592 = vmatpush1.msra.mxu0 0.0
      %1593 = vmatprep.subr.mxu0 0.0
      %1594 = vmatpush1.msra.mxu0 0.0
      %1595 = vmatprep.subr.mxu0 0.0
      %1596 = vmatpush1.msra.mxu0 0.0
      %1597 = vmatprep.subr.mxu0 0.0
      %1598 = vmatpush1.msra.mxu0 0.0
      %1599 = vmatprep.subr.mxu0 0.0
      %1600 = vmatpush1.msra.mxu0 0.0
      %1601 = vmatprep.subr.mxu0 0.0
      %1602 = vmatpush1.msra.mxu0 0.0
      %1603 = vmatprep.subr.mxu0 0.0
      %1604 = vmatpush1.msra.mxu0 0.0
      %1605 = vmatprep.subr.mxu0 0.0
      %1606 = vmatpush1.msra.mxu0 0.0
      %1607 = vmatprep.subr.mxu0 0.0
      %1608 = vmatpush1.msra.mxu0 0.0
      %1609 = vmatprep.subr.mxu0 0.0
      %1610 = vmatpush1.msra.mxu0 0.0
      %1611 = vmatprep.subr.mxu0 0.0
      %1612 = vmatpush1.msra.mxu0 0.0
      %1613 = vmatprep.subr.mxu0 0.0
      %1614 = vmatpush1.msra.mxu0 0.0
      %1615 = vmatprep.subr.mxu0 0.0
      %1616 = vmatpush1.msra.mxu0 0.0
      %1617 = vmatprep.subr.mxu0 0.0
      %1618 = vmatpush1.msra.mxu0 0.0
      %1619 = vmatprep.subr.mxu0 0.0
      %1620 = vmatpush1.msra.mxu0 0.0
      %1621 = vmatprep.mubr.f32.mxu0 0.0
      %1622 = vmatmul.mubr.f32.gmra.mrb[0].mxu0 %v1552
      %v1623 = vpop.f32.mrb[0].mxu0
      %v1624 = vadd.f32 0.0, %v1623
      %v1625 = vpop.f32.mrb[0].mxu0
      %v1626 = vadd.f32 0.0, %v1625
      %1627 = vmatprep.mubr.f32.mxu0 0.0
      %1628 = vmatmul.mubr.f32.gmra.mrb[0].mxu0 %v1555
      %v1629 = vpop.f32.mrb[0].mxu0
      %v1630 = vadd.f32 0.0, %v1629
      %v1631 = vpop.f32.mrb[0].mxu0
      %v1632 = vadd.f32 0.0, %v1631
      %1633 = vdwg.mxu0
      %v1634 = vadd.f32 %v1534, %v1624
      %v1635 = vadd.f32 %v1535, %v1626
      %v1636 = vadd.f32 %v1536, %v1630
      %v1637 = vadd.f32 %v1537, %v1632
      %s1638 = scalar_lea.vmem %s3, 64
      %v1639 = vld [vmem:[%s1638] sm:$0xff]
      %v1640 = vld [vmem:[%s1638 + $0x8] sm:$0xff]
      %v1642 = vsel %vm1271, %v1639, 0
      %v1645 = vsel %vm1271, %v1640, 0
      %1647 = vmatprep.subr.mxu0 %v1245
      %1648 = vmatpush1.msra.mxu0 %v1244
      %1649 = vmatprep.subr.mxu0 0.0
      %1650 = vmatpush1.msra.mxu0 0.0
      %1651 = vmatprep.subr.mxu0 0.0
      %1652 = vmatpush1.msra.mxu0 0.0
      %1653 = vmatprep.subr.mxu0 0.0
      %1654 = vmatpush1.msra.mxu0 0.0
      %1655 = vmatprep.subr.mxu0 0.0
      %1656 = vmatpush1.msra.mxu0 0.0
      %1657 = vmatprep.subr.mxu0 0.0
      %1658 = vmatpush1.msra.mxu0 0.0
      %1659 = vmatprep.subr.mxu0 0.0
      %1660 = vmatpush1.msra.mxu0 0.0
      %1661 = vmatprep.subr.mxu0 0.0
      %1662 = vmatpush1.msra.mxu0 0.0
      %1663 = vmatprep.subr.mxu0 0.0
      %1664 = vmatpush1.msra.mxu0 0.0
      %1665 = vmatprep.subr.mxu0 0.0
      %1666 = vmatpush1.msra.mxu0 0.0
      %1667 = vmatprep.subr.mxu0 0.0
      %1668 = vmatpush1.msra.mxu0 0.0
      %1669 = vmatprep.subr.mxu0 0.0
      %1670 = vmatpush1.msra.mxu0 0.0
      %1671 = vmatprep.subr.mxu0 0.0
      %1672 = vmatpush1.msra.mxu0 0.0
      %1673 = vmatprep.subr.mxu0 0.0
      %1674 = vmatpush1.msra.mxu0 0.0
      %1675 = vmatprep.subr.mxu0 0.0
      %1676 = vmatpush1.msra.mxu0 0.0
      %1677 = vmatprep.subr.mxu0 0.0
      %1678 = vmatpush1.msra.mxu0 0.0
      %1679 = vmatprep.subr.mxu0 0.0
      %1680 = vmatpush1.msra.mxu0 0.0
      %1681 = vmatprep.subr.mxu0 0.0
      %1682 = vmatpush1.msra.mxu0 0.0
      %1683 = vmatprep.subr.mxu0 0.0
      %1684 = vmatpush1.msra.mxu0 0.0
      %1685 = vmatprep.subr.mxu0 0.0
      %1686 = vmatpush1.msra.mxu0 0.0
      %1687 = vmatprep.subr.mxu0 0.0
      %1688 = vmatpush1.msra.mxu0 0.0
      %1689 = vmatprep.subr.mxu0 0.0
      %1690 = vmatpush1.msra.mxu0 0.0
      %1691 = vmatprep.subr.mxu0 0.0
      %1692 = vmatpush1.msra.mxu0 0.0
      %1693 = vmatprep.subr.mxu0 0.0
      %1694 = vmatpush1.msra.mxu0 0.0
      %1695 = vmatprep.subr.mxu0 0.0
      %1696 = vmatpush1.msra.mxu0 0.0
      %1697 = vmatprep.subr.mxu0 0.0
      %1698 = vmatpush1.msra.mxu0 0.0
      %1699 = vmatprep.subr.mxu0 0.0
      %1700 = vmatpush1.msra.mxu0 0.0
      %1701 = vmatprep.subr.mxu0 0.0
      %1702 = vmatpush1.msra.mxu0 0.0
      %1703 = vmatprep.subr.mxu0 0.0
      %1704 = vmatpush1.msra.mxu0 0.0
      %1705 = vmatprep.subr.mxu0 0.0
      %1706 = vmatpush1.msra.mxu0 0.0
      %1707 = vmatprep.subr.mxu0 0.0
      %1708 = vmatpush1.msra.mxu0 0.0
      %1709 = vmatprep.subr.mxu0 0.0
      %1710 = vmatpush1.msra.mxu0 0.0
      %1711 = vmatprep.mubr.f32.mxu0 0.0
      %1712 = vmatmul.mubr.f32.gmra.mrb[0].mxu0 %v1642
      %v1713 = vpop.f32.mrb[0].mxu0
      %v1714 = vadd.f32 0.0, %v1713
      %v1715 = vpop.f32.mrb[0].mxu0
      %v1716 = vadd.f32 0.0, %v1715
      %1717 = vmatprep.mubr.f32.mxu0 0.0
      %1718 = vmatmul.mubr.f32.gmra.mrb[0].mxu0 %v1645
      %v1719 = vpop.f32.mrb[0].mxu0
      %v1720 = vadd.f32 0.0, %v1719
      %v1721 = vpop.f32.mrb[0].mxu0
      %v1722 = vadd.f32 0.0, %v1721
      %1723 = vdwg.mxu0
      %v1724 = vadd.f32 %v1634, %v1714
      %v1725 = vadd.f32 %v1635, %v1716
      %v1726 = vadd.f32 %v1636, %v1720
      %v1727 = vadd.f32 %v1637, %v1722
      %1728 = vrot.lane.b32.xlu0 %v1244, 127
      %v1729 = vpop.permute.xlu0 %1728
      %1730 = vrot.lane.b32.xlu0 %v1245, 127
      %v1731 = vpop.permute.xlu0 %1730
      %v1732 = vsel %vm860, %v1729, %v1731
      %v1733 = vsel %vm860, %v1731, %v859
      %v1736 = vsel %vm388, %v1732, 0.0
      %v1737 = vsel %vm389, %v1733, 0.0
      %s1738 = scalar_lea.vmem %s3, 80
      %v1739 = vld [vmem:[%s1738] sm:$0xff]
      %v1740 = vld [vmem:[%s1738 + $0x8] sm:$0xff]
      %v1742 = vsel %vm1271, %v1739, 0
      %v1745 = vsel %vm1271, %v1740, 0
      %1747 = vmatprep.subr.mxu0 %v1737
      %1748 = vmatpush1.msra.mxu0 %v1736
      %1749 = vmatprep.subr.mxu0 0.0
      %1750 = vmatpush1.msra.mxu0 0.0
      %1751 = vmatprep.subr.mxu0 0.0
      %1752 = vmatpush1.msra.mxu0 0.0
      %1753 = vmatprep.subr.mxu0 0.0
      %1754 = vmatpush1.msra.mxu0 0.0
      %1755 = vmatprep.subr.mxu0 0.0
      %1756 = vmatpush1.msra.mxu0 0.0
      %1757 = vmatprep.subr.mxu0 0.0
      %1758 = vmatpush1.msra.mxu0 0.0
      %1759 = vmatprep.subr.mxu0 0.0
      %1760 = vmatpush1.msra.mxu0 0.0
      %1761 = vmatprep.subr.mxu0 0.0
      %1762 = vmatpush1.msra.mxu0 0.0
      %1763 = vmatprep.subr.mxu0 0.0
      %1764 = vmatpush1.msra.mxu0 0.0
      %1765 = vmatprep.subr.mxu0 0.0
      %1766 = vmatpush1.msra.mxu0 0.0
      %1767 = vmatprep.subr.mxu0 0.0
      %1768 = vmatpush1.msra.mxu0 0.0
      %1769 = vmatprep.subr.mxu0 0.0
      %1770 = vmatpush1.msra.mxu0 0.0
      %1771 = vmatprep.subr.mxu0 0.0
      %1772 = vmatpush1.msra.mxu0 0.0
      %1773 = vmatprep.subr.mxu0 0.0
      %1774 = vmatpush1.msra.mxu0 0.0
      %1775 = vmatprep.subr.mxu0 0.0
      %1776 = vmatpush1.msra.mxu0 0.0
      %1777 = vmatprep.subr.mxu0 0.0
      %1778 = vmatpush1.msra.mxu0 0.0
      %1779 = vmatprep.subr.mxu0 0.0
      %1780 = vmatpush1.msra.mxu0 0.0
      %1781 = vmatprep.subr.mxu0 0.0
      %1782 = vmatpush1.msra.mxu0 0.0
      %1783 = vmatprep.subr.mxu0 0.0
      %1784 = vmatpush1.msra.mxu0 0.0
      %1785 = vmatprep.subr.mxu0 0.0
      %1786 = vmatpush1.msra.mxu0 0.0
      %1787 = vmatprep.subr.mxu0 0.0
      %1788 = vmatpush1.msra.mxu0 0.0
      %1789 = vmatprep.subr.mxu0 0.0
      %1790 = vmatpush1.msra.mxu0 0.0
      %1791 = vmatprep.subr.mxu0 0.0
      %1792 = vmatpush1.msra.mxu0 0.0
      %1793 = vmatprep.subr.mxu0 0.0
      %1794 = vmatpush1.msra.mxu0 0.0
      %1795 = vmatprep.subr.mxu0 0.0
      %1796 = vmatpush1.msra.mxu0 0.0
      %1797 = vmatprep.subr.mxu0 0.0
      %1798 = vmatpush1.msra.mxu0 0.0
      %1799 = vmatprep.subr.mxu0 0.0
      %1800 = vmatpush1.msra.mxu0 0.0
      %1801 = vmatprep.subr.mxu0 0.0
      %1802 = vmatpush1.msra.mxu0 0.0
      %1803 = vmatprep.subr.mxu0 0.0
      %1804 = vmatpush1.msra.mxu0 0.0
      %1805 = vmatprep.subr.mxu0 0.0
      %1806 = vmatpush1.msra.mxu0 0.0
      %1807 = vmatprep.subr.mxu0 0.0
      %1808 = vmatpush1.msra.mxu0 0.0
      %1809 = vmatprep.subr.mxu0 0.0
      %1810 = vmatpush1.msra.mxu0 0.0
      %1811 = vmatprep.mubr.f32.mxu0 0.0
      %1812 = vmatmul.mubr.f32.gmra.mrb[0].mxu0 %v1742
      %v1813 = vpop.f32.mrb[0].mxu0
      %v1814 = vadd.f32 0.0, %v1813
      %v1815 = vpop.f32.mrb[0].mxu0
      %v1816 = vadd.f32 0.0, %v1815
      %1817 = vmatprep.mubr.f32.mxu0 0.0
      %1818 = vmatmul.mubr.f32.gmra.mrb[0].mxu0 %v1745
      %v1819 = vpop.f32.mrb[0].mxu0
      %v1820 = vadd.f32 0.0, %v1819
      %v1821 = vpop.f32.mrb[0].mxu0
      %v1822 = vadd.f32 0.0, %v1821
      %1823 = vdwg.mxu0
      %v1824 = vadd.f32 %v1724, %v1814
      %v1825 = vadd.f32 %v1725, %v1816
      %v1826 = vadd.f32 %v1726, %v1820
      %v1827 = vadd.f32 %v1727, %v1822
      %1828 = vrot.lane.b32.xlu0 %v1244, 113
      %v1829 = vpop.permute.xlu0 %1828
      %1830 = vrot.lane.b32.xlu0 %v1245, 113
      %v1831 = vpop.permute.xlu0 %1830
      %v1832 = vsel %vm957, %v1829, %v1831
      %v1833 = vsel %vm957, %v1831, %v956
      %v1836 = vsel %vm386, %v1832, 0.0
      %v1837 = vsel %vm387, %v1833, 0.0
      %s1838 = scalar_lea.vmem %s3, 96
      %v1839 = vld [vmem:[%s1838] sm:$0xff]
      %v1840 = vld [vmem:[%s1838 + $0x8] sm:$0xff]
      %v1842 = vsel %vm1271, %v1839, 0
      %v1845 = vsel %vm1271, %v1840, 0
      %1847 = vmatprep.subr.mxu0 %v1837
      %1848 = vmatpush1.msra.mxu0 %v1836
      %1849 = vmatprep.subr.mxu0 0.0
      %1850 = vmatpush1.msra.mxu0 0.0
      %1851 = vmatprep.subr.mxu0 0.0
      %1852 = vmatpush1.msra.mxu0 0.0
      %1853 = vmatprep.subr.mxu0 0.0
      %1854 = vmatpush1.msra.mxu0 0.0
      %1855 = vmatprep.subr.mxu0 0.0
      %1856 = vmatpush1.msra.mxu0 0.0
      %1857 = vmatprep.subr.mxu0 0.0
      %1858 = vmatpush1.msra.mxu0 0.0
      %1859 = vmatprep.subr.mxu0 0.0
      %1860 = vmatpush1.msra.mxu0 0.0
      %1861 = vmatprep.subr.mxu0 0.0
      %1862 = vmatpush1.msra.mxu0 0.0
      %1863 = vmatprep.subr.mxu0 0.0
      %1864 = vmatpush1.msra.mxu0 0.0
      %1865 = vmatprep.subr.mxu0 0.0
      %1866 = vmatpush1.msra.mxu0 0.0
      %1867 = vmatprep.subr.mxu0 0.0
      %1868 = vmatpush1.msra.mxu0 0.0
      %1869 = vmatprep.subr.mxu0 0.0
      %1870 = vmatpush1.msra.mxu0 0.0
      %1871 = vmatprep.subr.mxu0 0.0
      %1872 = vmatpush1.msra.mxu0 0.0
      %1873 = vmatprep.subr.mxu0 0.0
      %1874 = vmatpush1.msra.mxu0 0.0
      %1875 = vmatprep.subr.mxu0 0.0
      %1876 = vmatpush1.msra.mxu0 0.0
      %1877 = vmatprep.subr.mxu0 0.0
      %1878 = vmatpush1.msra.mxu0 0.0
      %1879 = vmatprep.subr.mxu0 0.0
      %1880 = vmatpush1.msra.mxu0 0.0
      %1881 = vmatprep.subr.mxu0 0.0
      %1882 = vmatpush1.msra.mxu0 0.0
      %1883 = vmatprep.subr.mxu0 0.0
      %1884 = vmatpush1.msra.mxu0 0.0
      %1885 = vmatprep.subr.mxu0 0.0
      %1886 = vmatpush1.msra.mxu0 0.0
      %1887 = vmatprep.subr.mxu0 0.0
      %1888 = vmatpush1.msra.mxu0 0.0
      %1889 = vmatprep.subr.mxu0 0.0
      %1890 = vmatpush1.msra.mxu0 0.0
      %1891 = vmatprep.subr.mxu0 0.0
      %1892 = vmatpush1.msra.mxu0 0.0
      %1893 = vmatprep.subr.mxu0 0.0
      %1894 = vmatpush1.msra.mxu0 0.0
      %1895 = vmatprep.subr.mxu0 0.0
      %1896 = vmatpush1.msra.mxu0 0.0
      %1897 = vmatprep.subr.mxu0 0.0
      %1898 = vmatpush1.msra.mxu0 0.0
      %1899 = vmatprep.subr.mxu0 0.0
      %1900 = vmatpush1.msra.mxu0 0.0
      %1901 = vmatprep.subr.mxu0 0.0
      %1902 = vmatpush1.msra.mxu0 0.0
      %1903 = vmatprep.subr.mxu0 0.0
      %1904 = vmatpush1.msra.mxu0 0.0
      %1905 = vmatprep.subr.mxu0 0.0
      %1906 = vmatpush1.msra.mxu0 0.0
      %1907 = vmatprep.subr.mxu0 0.0
      %1908 = vmatpush1.msra.mxu0 0.0
      %1909 = vmatprep.subr.mxu0 0.0
      %1910 = vmatpush1.msra.mxu0 0.0
      %1911 = vmatprep.mubr.f32.mxu0 0.0
      %1912 = vmatmul.mubr.f32.gmra.mrb[0].mxu0 %v1842
      %v1913 = vpop.f32.mrb[0].mxu0
      %v1914 = vadd.f32 0.0, %v1913
      %v1915 = vpop.f32.mrb[0].mxu0
      %v1916 = vadd.f32 0.0, %v1915
      %1917 = vmatprep.mubr.f32.mxu0 0.0
      %1918 = vmatmul.mubr.f32.gmra.mrb[0].mxu0 %v1845
      %v1919 = vpop.f32.mrb[0].mxu0
      %v1920 = vadd.f32 0.0, %v1919
      %v1921 = vpop.f32.mrb[0].mxu0
      %v1922 = vadd.f32 0.0, %v1921
      %1923 = vdwg.mxu0
      %v1924 = vadd.f32 %v1824, %v1914
      %v1925 = vadd.f32 %v1825, %v1916
      %v1926 = vadd.f32 %v1826, %v1920
      %v1927 = vadd.f32 %v1827, %v1922
      %s1928 = scalar_lea.vmem %s3, 112
      %v1929 = vld [vmem:[%s1928] sm:$0xff]
      %v1930 = vld [vmem:[%s1928 + $0x8] sm:$0xff]
      %1931 = vrot.lane.b32.xlu0 %v1244, 112
      %v1932 = vpop.permute.xlu0 %1931
      %1933 = vrot.lane.b32.xlu0 %v1245, 112
      %v1934 = vpop.permute.xlu0 %1933
      %v1935 = vsel %vm1056, %v1932, %v1934
      %v1936 = vsel %vm1056, %v1934, %v1055
      %v1940 = vsel %vm1271, %v1929, 0
      %v1943 = vsel %vm1271, %v1930, 0
      %1945 = vmatprep.subr.mxu0 %v1936
      %1946 = vmatpush1.msra.mxu0 %v1935
      %1947 = vmatprep.subr.mxu0 0.0
      %1948 = vmatpush1.msra.mxu0 0.0
      %1949 = vmatprep.subr.mxu0 0.0
      %1950 = vmatpush1.msra.mxu0 0.0
      %1951 = vmatprep.subr.mxu0 0.0
      %1952 = vmatpush1.msra.mxu0 0.0
      %1953 = vmatprep.subr.mxu0 0.0
      %1954 = vmatpush1.msra.mxu0 0.0
      %1955 = vmatprep.subr.mxu0 0.0
      %1956 = vmatpush1.msra.mxu0 0.0
      %1957 = vmatprep.subr.mxu0 0.0
      %1958 = vmatpush1.msra.mxu0 0.0
      %1959 = vmatprep.subr.mxu0 0.0
      %1960 = vmatpush1.msra.mxu0 0.0
      %1961 = vmatprep.subr.mxu0 0.0
      %1962 = vmatpush1.msra.mxu0 0.0
      %1963 = vmatprep.subr.mxu0 0.0
      %1964 = vmatpush1.msra.mxu0 0.0
      %1965 = vmatprep.subr.mxu0 0.0
      %1966 = vmatpush1.msra.mxu0 0.0
      %1967 = vmatprep.subr.mxu0 0.0
      %1968 = vmatpush1.msra.mxu0 0.0
      %1969 = vmatprep.subr.mxu0 0.0
      %1970 = vmatpush1.msra.mxu0 0.0
      %1971 = vmatprep.subr.mxu0 0.0
      %1972 = vmatpush1.msra.mxu0 0.0
      %1973 = vmatprep.subr.mxu0 0.0
      %1974 = vmatpush1.msra.mxu0 0.0
      %1975 = vmatprep.subr.mxu0 0.0
      %1976 = vmatpush1.msra.mxu0 0.0
      %1977 = vmatprep.subr.mxu0 0.0
      %1978 = vmatpush1.msra.mxu0 0.0
      %1979 = vmatprep.subr.mxu0 0.0
      %1980 = vmatpush1.msra.mxu0 0.0
      %1981 = vmatprep.subr.mxu0 0.0
      %1982 = vmatpush1.msra.mxu0 0.0
      %1983 = vmatprep.subr.mxu0 0.0
      %1984 = vmatpush1.msra.mxu0 0.0
      %1985 = vmatprep.subr.mxu0 0.0
      %1986 = vmatpush1.msra.mxu0 0.0
      %1987 = vmatprep.subr.mxu0 0.0
      %1988 = vmatpush1.msra.mxu0 0.0
      %1989 = vmatprep.subr.mxu0 0.0
      %1990 = vmatpush1.msra.mxu0 0.0
      %1991 = vmatprep.subr.mxu0 0.0
      %1992 = vmatpush1.msra.mxu0 0.0
      %1993 = vmatprep.subr.mxu0 0.0
      %1994 = vmatpush1.msra.mxu0 0.0
      %1995 = vmatprep.subr.mxu0 0.0
      %1996 = vmatpush1.msra.mxu0 0.0
      %1997 = vmatprep.subr.mxu0 0.0
      %1998 = vmatpush1.msra.mxu0 0.0
      %1999 = vmatprep.subr.mxu0 0.0
      %2000 = vmatpush1.msra.mxu0 0.0
      %2001 = vmatprep.subr.mxu0 0.0
      %2002 = vmatpush1.msra.mxu0 0.0
      %2003 = vmatprep.subr.mxu0 0.0
      %2004 = vmatpush1.msra.mxu0 0.0
      %2005 = vmatprep.subr.mxu0 0.0
      %2006 = vmatpush1.msra.mxu0 0.0
      %2007 = vmatprep.subr.mxu0 0.0
      %2008 = vmatpush1.msra.mxu0 0.0
      %2009 = vmatprep.mubr.f32.mxu0 0.0
      %2010 = vmatmul.mubr.f32.gmra.mrb[0].mxu0 %v1940
      %v2011 = vpop.f32.mrb[0].mxu0
      %v2012 = vadd.f32 0.0, %v2011
      %v2013 = vpop.f32.mrb[0].mxu0
      %v2014 = vadd.f32 0.0, %v2013
      %2015 = vmatprep.mubr.f32.mxu0 0.0
      %2016 = vmatmul.mubr.f32.gmra.mrb[0].mxu0 %v1943
      %v2017 = vpop.f32.mrb[0].mxu0
      %v2018 = vadd.f32 0.0, %v2017
      %v2019 = vpop.f32.mrb[0].mxu0
      %v2020 = vadd.f32 0.0, %v2019
      %2021 = vdwg.mxu0
      %v2022 = vadd.f32 %v1924, %v2012
      %v2023 = vadd.f32 %v1925, %v2014
      %v2024 = vadd.f32 %v1926, %v2018
      %v2025 = vadd.f32 %v1927, %v2020
      %2026 = vrot.lane.b32.xlu0 %v1244, 111
      %v2027 = vpop.permute.xlu0 %2026
      %2028 = vrot.lane.b32.xlu0 %v1245, 111
      %v2029 = vpop.permute.xlu0 %2028
      %v2030 = vsel %vm1145, %v2027, %v2029
      %v2031 = vsel %vm1145, %v2029, %v1144
      %v2034 = vsel %vm388, %v2030, 0.0
      %v2035 = vsel %vm389, %v2031, 0.0
      %s2036 = scalar_lea.vmem %s3, 128
      %v2037 = vld [vmem:[%s2036] sm:$0xff]
      %v2038 = vld [vmem:[%s2036 + $0x8] sm:$0xff]
      %v2040 = vsel %vm1271, %v2037, 0
      %v2043 = vsel %vm1271, %v2038, 0
      %2045 = vmatprep.subr.mxu0 %v2035
      %2046 = vmatpush1.msra.mxu0 %v2034
      %2047 = vmatprep.subr.mxu0 0.0
      %2048 = vmatpush1.msra.mxu0 0.0
      %2049 = vmatprep.subr.mxu0 0.0
      %2050 = vmatpush1.msra.mxu0 0.0
      %2051 = vmatprep.subr.mxu0 0.0
      %2052 = vmatpush1.msra.mxu0 0.0
      %2053 = vmatprep.subr.mxu0 0.0
      %2054 = vmatpush1.msra.mxu0 0.0
      %2055 = vmatprep.subr.mxu0 0.0
      %2056 = vmatpush1.msra.mxu0 0.0
      %2057 = vmatprep.subr.mxu0 0.0
      %2058 = vmatpush1.msra.mxu0 0.0
      %2059 = vmatprep.subr.mxu0 0.0
      %2060 = vmatpush1.msra.mxu0 0.0
      %2061 = vmatprep.subr.mxu0 0.0
      %2062 = vmatpush1.msra.mxu0 0.0
      %2063 = vmatprep.subr.mxu0 0.0
      %2064 = vmatpush1.msra.mxu0 0.0
      %2065 = vmatprep.subr.mxu0 0.0
      %2066 = vmatpush1.msra.mxu0 0.0
      %2067 = vmatprep.subr.mxu0 0.0
      %2068 = vmatpush1.msra.mxu0 0.0
      %2069 = vmatprep.subr.mxu0 0.0
      %2070 = vmatpush1.msra.mxu0 0.0
      %2071 = vmatprep.subr.mxu0 0.0
      %2072 = vmatpush1.msra.mxu0 0.0
      %2073 = vmatprep.subr.mxu0 0.0
      %2074 = vmatpush1.msra.mxu0 0.0
      %2075 = vmatprep.subr.mxu0 0.0
      %2076 = vmatpush1.msra.mxu0 0.0
      %2077 = vmatprep.subr.mxu0 0.0
      %2078 = vmatpush1.msra.mxu0 0.0
      %2079 = vmatprep.subr.mxu0 0.0
      %2080 = vmatpush1.msra.mxu0 0.0
      %2081 = vmatprep.subr.mxu0 0.0
      %2082 = vmatpush1.msra.mxu0 0.0
      %2083 = vmatprep.subr.mxu0 0.0
      %2084 = vmatpush1.msra.mxu0 0.0
      %2085 = vmatprep.subr.mxu0 0.0
      %2086 = vmatpush1.msra.mxu0 0.0
      %2087 = vmatprep.subr.mxu0 0.0
      %2088 = vmatpush1.msra.mxu0 0.0
      %2089 = vmatprep.subr.mxu0 0.0
      %2090 = vmatpush1.msra.mxu0 0.0
      %2091 = vmatprep.subr.mxu0 0.0
      %2092 = vmatpush1.msra.mxu0 0.0
      %2093 = vmatprep.subr.mxu0 0.0
      %2094 = vmatpush1.msra.mxu0 0.0
      %2095 = vmatprep.subr.mxu0 0.0
      %2096 = vmatpush1.msra.mxu0 0.0
      %2097 = vmatprep.subr.mxu0 0.0
      %2098 = vmatpush1.msra.mxu0 0.0
      %2099 = vmatprep.subr.mxu0 0.0
      %2100 = vmatpush1.msra.mxu0 0.0
      %2101 = vmatprep.subr.mxu0 0.0
      %2102 = vmatpush1.msra.mxu0 0.0
      %2103 = vmatprep.subr.mxu0 0.0
      %2104 = vmatpush1.msra.mxu0 0.0
      %2105 = vmatprep.subr.mxu0 0.0
      %2106 = vmatpush1.msra.mxu0 0.0
      %2107 = vmatprep.subr.mxu0 0.0
      %2108 = vmatpush1.msra.mxu0 0.0
      %2109 = vmatprep.mubr.f32.mxu0 0.0
      %2110 = vmatmul.mubr.f32.gmra.mrb[0].mxu0 %v2040
      %v2111 = vpop.f32.mrb[0].mxu0
      %v2112 = vadd.f32 0.0, %v2111
      %v2113 = vpop.f32.mrb[0].mxu0
      %v2114 = vadd.f32 0.0, %v2113
      %2115 = vmatprep.mubr.f32.mxu0 0.0
      %2116 = vmatmul.mubr.f32.gmra.mrb[0].mxu0 %v2043
      %v2117 = vpop.f32.mrb[0].mxu0
      %v2118 = vadd.f32 0.0, %v2117
      %v2119 = vpop.f32.mrb[0].mxu0
      %v2120 = vadd.f32 0.0, %v2119
      %2121 = vdwg.mxu0
      %v2122 = vadd.f32 %v2022, %v2112
      %v2123 = vadd.f32 %v2023, %v2114
      %v2124 = vadd.f32 %v2024, %v2118
      %v2125 = vadd.f32 %v2025, %v2120
      %v2126 = vld [vmem:[%s4] sm:$0xff]
      %v2127 = vld [vmem:[%s4 + $0x8] sm:$0xff]
      %2129 = vset.pattern.permute.xlu0 0
      %2130 = vperm.xlu0 %2129, %v2126
      %v2131 = vpop.permute.xlu0 %2130
      %2134 = vset.pattern.permute.xlu0 0
      %2135 = vperm.xlu0 %2134, %v2127
      %v2136 = vpop.permute.xlu0 %2135
      %v2138 = vadd.f32 %v2122, %v2131
      %v2139 = vadd.f32 %v2123, %v2131
      %v2140 = vadd.f32 %v2124, %v2136
      %v2141 = vadd.f32 %v2125, %v2136
      %2142 = vst [vmem:[%s347] sm:$0xff] %v2138
      %2143 = vst [vmem:[%s347 + $0x8] sm:$0xff] %v2139
      %2144 = vst [vmem:[%s347 + $0x10] sm:$0xff] %v2140
      %2145 = vst [vmem:[%s347 + $0x18] sm:$0xff] %v2141
      %v2146 = vmax.f32 %v2138, 0.0
      %v2147 = vmax.f32 %v2139, 0.0
      %v2148 = vmax.f32 %v2140, 0.0
      %v2149 = vmax.f32 %v2141, 0.0
      %v2150 = vadd.f32 %v2146, %v2147
      %2151 = vadd.xlane.f32.xlu0 %v2150
      %v2152 = vpop.xlane.xlu0 %2151
      %v2153 = vadd.f32 %v2148, %v2149
      %2154 = vadd.xlane.f32.xlu0 %v2153
      %v2155 = vpop.xlane.xlu0 %2154
      %v2156 = vmul.f32 %v2152, 0.00390625
      %v2157 = vmul.f32 %v2155, 0.00390625
      %2158 = vst.msk [vmem:[%s352] sm:$0xff] %vm681, %v2156
      %2159 = vst.msk [vmem:[%s352 + $0x8] sm:$0xff] %vm681, %v2157
      %v2160 = vld [vmem:[%s5] sm:$0xff]
      %v2161 = vld [vmem:[%s5 + $0x8] sm:$0xff]
      %v2162 = vld [vmem:[%s5 + $0x10] sm:$0xff]
      %v2163 = vld [vmem:[%s5 + $0x18] sm:$0xff]
      %v2164 = vld [vmem:[%s6] sm:$0xff]
      %v2165 = vld [vmem:[%s6 + $0x8] sm:$0xff]
      %v2166 = vld [vmem:[%s6 + $0x10] sm:$0xff]
      %v2167 = vld [vmem:[%s6 + $0x18] sm:$0xff]
      %v2169 = vsel %vm415, %v2160, 0
      %v2172 = vsel %vm415, %v2161, 0
      %v2175 = vsel %vm415, %v2162, 0
      %v2178 = vsel %vm415, %v2163, 0
      %2180 = vmatprep.subr.mxu0 0.0
      %2181 = vmatpush1.msra.mxu0 %v2156
      %2182 = vmatprep.subr.mxu0 0.0
      %2183 = vmatpush1.msra.mxu0 %v2157
      %2184 = vmatprep.subr.mxu0 0.0
      %2185 = vmatpush1.msra.mxu0 0.0
      %2186 = vmatprep.subr.mxu0 0.0
      %2187 = vmatpush1.msra.mxu0 0.0
      %2188 = vmatprep.subr.mxu0 0.0
      %2189 = vmatpush1.msra.mxu0 0.0
      %2190 = vmatprep.subr.mxu0 0.0
      %2191 = vmatpush1.msra.mxu0 0.0
      %2192 = vmatprep.subr.mxu0 0.0
      %2193 = vmatpush1.msra.mxu0 0.0
      %2194 = vmatprep.subr.mxu0 0.0
      %2195 = vmatpush1.msra.mxu0 0.0
      %2196 = vmatprep.subr.mxu0 0.0
      %2197 = vmatpush1.msra.mxu0 0.0
      %2198 = vmatprep.subr.mxu0 0.0
      %2199 = vmatpush1.msra.mxu0 0.0
      %2200 = vmatprep.subr.mxu0 0.0
      %2201 = vmatpush1.msra.mxu0 0.0
      %2202 = vmatprep.subr.mxu0 0.0
      %2203 = vmatpush1.msra.mxu0 0.0
      %2204 = vmatprep.subr.mxu0 0.0
      %2205 = vmatpush1.msra.mxu0 0.0
      %2206 = vmatprep.subr.mxu0 0.0
      %2207 = vmatpush1.msra.mxu0 0.0
      %2208 = vmatprep.subr.mxu0 0.0
      %2209 = vmatpush1.msra.mxu0 0.0
      %2210 = vmatprep.subr.mxu0 0.0
      %2211 = vmatpush1.msra.mxu0 0.0
      %2212 = vmatprep.subr.mxu0 0.0
      %2213 = vmatpush1.msra.mxu0 0.0
      %2214 = vmatprep.subr.mxu0 0.0
      %2215 = vmatpush1.msra.mxu0 0.0
      %2216 = vmatprep.subr.mxu0 0.0
      %2217 = vmatpush1.msra.mxu0 0.0
      %2218 = vmatprep.subr.mxu0 0.0
      %2219 = vmatpush1.msra.mxu0 0.0
      %2220 = vmatprep.subr.mxu0 0.0
      %2221 = vmatpush1.msra.mxu0 0.0
      %2222 = vmatprep.subr.mxu0 0.0
      %2223 = vmatpush1.msra.mxu0 0.0
      %2224 = vmatprep.subr.mxu0 0.0
      %2225 = vmatpush1.msra.mxu0 0.0
      %2226 = vmatprep.subr.mxu0 0.0
      %2227 = vmatpush1.msra.mxu0 0.0
      %2228 = vmatprep.subr.mxu0 0.0
      %2229 = vmatpush1.msra.mxu0 0.0
      %2230 = vmatprep.subr.mxu0 0.0
      %2231 = vmatpush1.msra.mxu0 0.0
      %2232 = vmatprep.subr.mxu0 0.0
      %2233 = vmatpush1.msra.mxu0 0.0
      %2234 = vmatprep.subr.mxu0 0.0
      %2235 = vmatpush1.msra.mxu0 0.0
      %2236 = vmatprep.subr.mxu0 0.0
      %2237 = vmatpush1.msra.mxu0 0.0
      %2238 = vmatprep.subr.mxu0 0.0
      %2239 = vmatpush1.msra.mxu0 0.0
      %2240 = vmatprep.subr.mxu0 0.0
      %2241 = vmatpush1.msra.mxu0 0.0
      %2242 = vmatprep.subr.mxu0 0.0
      %2243 = vmatpush1.msra.mxu0 0.0
      %2244 = vmatprep.mubr.f32.mxu0 0.0
      %2245 = vmatmul.mubr.f32.gmra.mrb[0].mxu0 %v2169
      %v2246 = vpop.f32.mrb[0].mxu0
      %v2247 = vadd.f32 %v2164, %v2246
      %v2248 = vpop.f32.mrb[0].mxu0
      %2249 = vmatprep.mubr.f32.mxu0 0.0
      %2250 = vmatmul.mubr.f32.gmra.mrb[0].mxu0 %v2172
      %v2251 = vpop.f32.mrb[0].mxu0
      %v2252 = vadd.f32 %v2165, %v2251
      %v2253 = vpop.f32.mrb[0].mxu0
      %2254 = vmatprep.mubr.f32.mxu0 0.0
      %2255 = vmatmul.mubr.f32.gmra.mrb[0].mxu0 %v2175
      %v2256 = vpop.f32.mrb[0].mxu0
      %v2257 = vadd.f32 %v2166, %v2256
      %v2258 = vpop.f32.mrb[0].mxu0
      %2259 = vmatprep.mubr.f32.mxu0 0.0
      %2260 = vmatmul.mubr.f32.gmra.mrb[0].mxu0 %v2178
      %v2261 = vpop.f32.mrb[0].mxu0
      %v2262 = vadd.f32 %v2167, %v2261
      %v2263 = vpop.f32.mrb[0].mxu0
      %2264 = vdwg.mxu0
      %2265 = vst.msk [vmem:[%s357] sm:$0xff] %vm681, %v2247
      %2266 = vst.msk [vmem:[%s357 + $0x8] sm:$0xff] %vm681, %v2252
      %2267 = vst.msk [vmem:[%s357 + $0x10] sm:$0xff] %vm681, %v2257
      %2268 = vst.msk [vmem:[%s357 + $0x18] sm:$0xff] %vm681, %v2262
      %p2269 = scmp.lt.s32.totalorder %s21, 1
      %s2270 = scalar_select %p2269, %s21, 1
      %s2271 = smul.addr %s2270, 4
      %s2272 = smul.addr %s2271, 8
      %s2273 = scalar_lea.vmem %s7, %s2272
      %p2274 = scmp.lt.s32.totalorder %s21, 1
      %s2275 = scalar_select %p2274, %s21, 1
      %s2276 = smul.addr %s2275, 2
      %s2277 = smul.addr %s2276, 8
      %s2278 = scalar_lea.vmem %s8, %s2277
      %p2279 = scmp.lt.s32.totalorder %s21, 1
      %s2280 = scalar_select %p2279, %s21, 1
      %s2281 = smul.addr %s2280, 4
      %s2282 = smul.addr %s2281, 8
      %s2283 = scalar_lea.vmem %s9, %s2282
      // Predicated region
      $region49: #{feature_extractor_forward.1} parent=47 // pred_check
        %p2284 = pneg %p191
      $region50: #{feature_extractor_forward.1} parent=47 // pred_check_branch
        %2286 = sbr.rel (%p2284) target = $region52
      $region51: #{feature_extractor_forward.1} parent=47 // pred_region
        _
      $region52: #{feature_extractor_forward.1} parent=47 // pred_fallthru
        _
      // Predicated region
      $region53: #{feature_extractor_forward.1} parent=47 // pred_check
        %p2287 = pneg %p217
      $region54: #{feature_extractor_forward.1} parent=47 // pred_check_branch
        %2289 = sbr.rel (%p2287) target = $region56
      $region55: #{feature_extractor_forward.1} parent=47 // pred_region
        _
      $region56: #{feature_extractor_forward.1} parent=47 // pred_fallthru
        _
      // Predicated region
      $region57: #{feature_extractor_forward.1} parent=47 // pred_check
        %p2290 = pneg %p243
      $region58: #{feature_extractor_forward.1} parent=47 // pred_check_branch
        %2292 = sbr.rel (%p2290) target = $region60
      $region59: #{feature_extractor_forward.1} parent=47 // pred_region
        _
      $region60: #{feature_extractor_forward.1} parent=47 // pred_fallthru
        _
    $region48: #{feature_extractor_forward.1} parent=5 // pred_fallthru
      _
    %p2293 = scmp.le.s32.totalorder 2, %s16
    // Predicated region
    $region61: #{feature_extractor_forward.1} parent=5 // pred_check
      %p2294 = pneg %p2293
    $region62: #{feature_extractor_forward.1} parent=5 // pred_check_branch
      %2296 = sbr.rel (%p2294) target = $region64
    $region63: #{feature_extractor_forward.1} parent=5 // pred_region
      %s2297 = ssub.s32 %s16, 2
      // Predicated region
      $region65: #{feature_extractor_forward.1} parent=63 // pred_check
        %p2298 = pneg %p197
      $region66: #{feature_extractor_forward.1} parent=63 // pred_check_branch
        %2300 = sbr.rel (%p2298) target = $region68
      $region67: #{feature_extractor_forward.1} parent=63 // pred_region
        %p2301 = scmp.lt.s32.totalorder %s22, 1
        %s2302 = scalar_select %p2301, %s22, 1
        %s2303 = smul.addr %s2302, 4
        %s2304 = smul.addr %s2303, 8
        %s2305 = scalar_lea.vmem %s7, %s2304
      $region68: #{feature_extractor_forward.1} parent=63 // pred_fallthru
        _
      // Predicated region
      $region69: #{feature_extractor_forward.1} parent=63 // pred_check
        %p2306 = pneg %p223
      $region70: #{feature_extractor_forward.1} parent=63 // pred_check_branch
        %2308 = sbr.rel (%p2306) target = $region72
      $region71: #{feature_extractor_forward.1} parent=63 // pred_region
        %p2309 = scmp.lt.s32.totalorder %s22, 1
        %s2310 = scalar_select %p2309, %s22, 1
        %s2311 = smul.addr %s2310, 2
        %s2312 = smul.addr %s2311, 8
        %s2313 = scalar_lea.vmem %s8, %s2312
      $region72: #{feature_extractor_forward.1} parent=63 // pred_fallthru
        _
      // Predicated region
      $region73: #{feature_extractor_forward.1} parent=63 // pred_check
        %p2314 = pneg %p249
      $region74: #{feature_extractor_forward.1} parent=63 // pred_check_branch
        %2316 = sbr.rel (%p2314) target = $region76
      $region75: #{feature_extractor_forward.1} parent=63 // pred_region
        %p2317 = scmp.lt.s32.totalorder %s22, 1
        %s2318 = scalar_select %p2317, %s22, 1
        %s2319 = smul.addr %s2318, 4
        %s2320 = smul.addr %s2319, 8
        %s2321 = scalar_lea.vmem %s9, %s2320
      $region76: #{feature_extractor_forward.1} parent=63 // pred_fallthru
        _
    $region64: #{feature_extractor_forward.1} parent=5 // pred_fallthru
      _
  $region6: #{feature_extractor_forward.1} parent=0 // loop_footer
    %s20 = sadd.s32 1, %s16
  $region7: #{feature_extractor_forward.1} parent=0 // loop_footer_branch
    %15 = sbr.rel target = $region3
  $region8: #{feature_extractor_forward.1} parent=0 // loop_exit
    _

</llo_original>
